<compile_context>
chip_gen: v6e
topology: v6e:2x2x1
jax: 0.10.0
libtpu: 0.0.40
codegen_flags: <defaults>
</compile_context>

<pallas_src>
import functools

import jax
import jax.numpy as jnp
from jax.experimental import pallas as pl
from jax.experimental.pallas import tpu as pltpu

EMB_DIM = 32
NUM_LAYER = 5
NUM_TASKS = 3
ATOM_VOCABS = (7, 5)   # synthetic AtomEncoder: 2 categorical node features
BOND_VOCABS = (5, 3)   # synthetic BondEncoder: 2 categorical edge features
BN_EPS = 1e-5

# lane-dense padded widths
D_PAD = 128            # emb_dim (32)      -> 128 lanes
H_PAD = 128            # 2*emb_dim (64)    -> 128 lanes
T_PAD = 128            # num_tasks (3)     -> 128 lanes


def _round_up(x, m):
    return (x + m - 1) // m * m


def _pad2(a, rows, cols):
    return jnp.pad(a, ((0, rows - a.shape[0]), (0, cols - a.shape[1])))


def _fold_bn(bn):
    """Eval-mode BatchNorm -> (scale, shift):  y = x*scale + shift."""
    gamma, beta, mean, var = bn
    scale = gamma * jax.lax.rsqrt(var + BN_EPS)
    shift = beta - mean * scale
    return scale, shift


def _stack_pad(mats, rows, cols, dtype=jnp.float32, total=None):
    mats = [_pad2(m, rows, cols) for m in mats]
    if total is not None:
        while len(mats) < total:          # pad unused (last-layer VN) slots
            mats.append(jnp.zeros((rows, cols), jnp.float32))
    return jnp.stack(mats).astype(dtype)


# ----------------------------------------------------------------------------
# Fused Pallas kernel: one grid step == one GNN layer
# ----------------------------------------------------------------------------
def _fused_gnn_kernel(
    eps_ref,                                          # SMEM [L] f32 (GIN eps)
    h0_ref, src_ref, dstT_ref, n2g_ref, pool_ref, invc_ref,   # invariant
    ee_ref,                                           # per-layer edge embeds
    w1_ref, b1_ref, s1_ref, t1_ref, w2_ref, b2_ref,   # GIN MLP (+folded BN1)
    sl_ref, tl_ref,                                   # per-layer BN (folded)
    vw1_ref, vb1_ref, vs1_ref, vt1_ref,               # VN MLP (+folded BNs)
    vw2_ref, vb2_ref, vs2_ref, vt2_ref,
    pw_ref, pb_ref,                                   # prediction head
    out_ref,                                          # [Gp, T_PAD] f32
    h_ref, vn_ref,                                    # VMEM scratch (resident)
):
    layer = pl.program_id(0)
    nlayer = pl.num_programs(0)
    f32 = jnp.float32
    bf16 = jnp.bfloat16

    @pl.when(layer == 0)
    def _init():
        h_ref[...] = h0_ref[...]                      # AtomEncoder output
        vn_ref[...] = jnp.zeros_like(vn_ref)          # VN embedding init = 0

    vn_old = vn_ref[...]
    # h_list[layer] = h_list[layer] + virtualnode_embedding[batch]
    h_in = h_ref[...] + jnp.dot(n2g_ref[...], vn_old.astype(bf16),
                                preferred_element_type=f32)
    h_in_bf = h_in.astype(bf16)

    # ---- virtual-node update (uses OLD vn + VN-added h); not on last layer --
    @pl.when(layer < nlayer - 1)
    def _vn_update():
        vt = jnp.dot(pool_ref[...], h_in_bf, preferred_element_type=f32) + vn_old
        z = jnp.dot(vt.astype(bf16), vw1_ref[...],
                    preferred_element_type=f32) + vb1_ref[...]
        z = jnp.maximum(z * vs1_ref[...] + vt1_ref[...], 0.0)      # BN + ReLU
        z = jnp.dot(z.astype(bf16), vw2_ref[...],
                    preferred_element_type=f32) + vb2_ref[...]
        vn_ref[...] = jnp.maximum(z * vs2_ref[...] + vt2_ref[...], 0.0)

    # ---- GIN aggregation: gather(src) -> +edge_emb -> ReLU -> scatter(dst) --
    x_src = jnp.dot(src_ref[...], h_in_bf, preferred_element_type=f32)
    msg = jnp.maximum(x_src + ee_ref[...], 0.0)
    agg = jnp.dot(dstT_ref[...], msg.astype(bf16), preferred_element_type=f32)
    pre = (1.0 + eps_ref[layer]) * h_in + agg

    # ---- GIN MLP: Linear -> BN(eval) -> ReLU -> Linear, then per-layer BN ---
    z = jnp.dot(pre.astype(bf16), w1_ref[...],
                preferred_element_type=f32) + b1_ref[...]
    z = jnp.maximum(z * s1_ref[...] + t1_ref[...], 0.0)
    h_new = jnp.dot(z.astype(bf16), w2_ref[...],
                    preferred_element_type=f32) + b2_ref[...]
    h_bn = h_new * sl_ref[...] + tl_ref[...]

    @pl.when(layer != nlayer - 1)
    def _store_relu():
        h_ref[...] = jnp.maximum(h_bn, 0.0)           # dropout = identity (eval)

    # ---- fused epilogue on the last layer: mean-pool + prediction head ------
    @pl.when(layer == nlayer - 1)
    def _head():
        hg = jnp.dot(pool_ref[...], h_bn.astype(bf16),
                     preferred_element_type=f32) * invc_ref[...]   # mean pool
        out_ref[...] = jnp.dot(hg.astype(bf16), pw_ref[...],
                               preferred_element_type=f32) + pb_ref[...]


def _fused_gnn(eps_all, h0, src_oh, dstT_oh, n2g, pool, invc, ee_all,
               w1, b1, s1, t1, w2, b2, sl, tl,
               vw1, vb1, vs1, vt1, vw2, vb2, vs2, vt2, pw, pb):
    L, Ep, Dp = ee_all.shape
    Np = h0.shape[0]
    Gp = pool.shape[0]
    Hp = w1.shape[2]
    Tp = pw.shape[1]

    inv2 = lambda l: (0, 0)        # loop-invariant blocks: stay VMEM-resident
    per3 = lambda l: (l, 0, 0)     # per-layer stacked parameters

    in_specs = [
        pl.BlockSpec(memory_space=pltpu.MemorySpace.SMEM),   # eps (L,) scalar
        pl.BlockSpec((Np, Dp), inv2),                        # h0
        pl.BlockSpec((Ep, Np), inv2),                        # src one-hot
        pl.BlockSpec((Np, Ep), inv2),                        # dst one-hot^T
        pl.BlockSpec((Np, Gp), inv2),                        # node -> graph
        pl.BlockSpec((Gp, Np), inv2),                        # graph add-pool
        pl.BlockSpec((Gp, 1), inv2),                         # 1 / node counts
        pl.BlockSpec((None, Ep, Dp), per3),                  # edge embeddings
        pl.BlockSpec((None, Dp, Hp), per3),                  # w1
        pl.BlockSpec((None, 1, Hp), per3),                   # b1
        pl.BlockSpec((None, 1, Hp), per3),                   # bn1 scale
        pl.BlockSpec((None, 1, Hp), per3),                   # bn1 shift
        pl.BlockSpec((None, Hp, Dp), per3),                  # w2
        pl.BlockSpec((None, 1, Dp), per3),                   # b2
        pl.BlockSpec((None, 1, Dp), per3),                   # layer-bn scale
        pl.BlockSpec((None, 1, Dp), per3),                   # layer-bn shift
        pl.BlockSpec((None, Dp, Hp), per3),                  # vn w1
        pl.BlockSpec((None, 1, Hp), per3),                   # vn b1
        pl.BlockSpec((None, 1, Hp), per3),                   # vn bn1 scale
        pl.BlockSpec((None, 1, Hp), per3),                   # vn bn1 shift
        pl.BlockSpec((None, Hp, Dp), per3),                  # vn w2
        pl.BlockSpec((None, 1, Dp), per3),                   # vn b2
        pl.BlockSpec((None, 1, Dp), per3),                   # vn bn2 scale
        pl.BlockSpec((None, 1, Dp), per3),                   # vn bn2 shift
        pl.BlockSpec((Dp, Tp), inv2),                        # pred weight
        pl.BlockSpec((1, Tp), inv2),                         # pred bias
    ]

    # TODO(synk): for large graphs, replace materialized [E,N] one-hot matrices
    # with index-built tiles (scalar-prefetched src/dst + iota compare) and tile
    # E/N with extra grid axes (v7x 64 MiB VMEM is hit first); a "parallel"
    # node-tile axis would also let v7x's 2 TensorCores split the work.
    return pl.pallas_call(
        _fused_gnn_kernel,
        grid=(L,),
        out_shape=jax.ShapeDtypeStruct((Gp, Tp), jnp.float32),
        in_specs=in_specs,
        out_specs=pl.BlockSpec((Gp, Tp), inv2),
        scratch_shapes=[
            pltpu.VMEM((Np, Dp), jnp.float32),   # h  (node embeddings)
            pltpu.VMEM((Gp, Dp), jnp.float32),   # vn (virtual-node embeddings)
        ],
        compiler_params=pltpu.CompilerParams(
            dimension_semantics=("arbitrary",)),
    )(eps_all, h0, src_oh, dstT_oh, n2g, pool, invc, ee_all,
      w1, b1, s1, t1, w2, b2, sl, tl,
      vw1, vb1, vs1, vt1, vw2, vb2, vs2, vt2, pw, pb)


# ----------------------------------------------------------------------------
# Parameter init (deterministic, synthetic) — same model as before
# ----------------------------------------------------------------------------
def init_params(key, num_layer=NUM_LAYER, emb_dim=EMB_DIM, num_tasks=NUM_TASKS):
    keys = iter(jax.random.split(key, 512))

    def dense(fan_in, shape):
        return (jax.random.normal(next(keys), shape, jnp.float32)
                / jnp.sqrt(jnp.float32(fan_in)))

    def bn(dim):
        gamma = 1.0 + 0.1 * jax.random.normal(next(keys), (dim,), jnp.float32)
        beta = 0.1 * jax.random.normal(next(keys), (dim,), jnp.float32)
        mean = 0.1 * jax.random.normal(next(keys), (dim,), jnp.float32)
        var = 0.5 + jnp.abs(jax.random.normal(next(keys), (dim,), jnp.float32))
        return (gamma, beta, mean, var)

    params = {}
    params["atom_emb"] = [
        0.1 * jax.random.normal(next(keys), (v, emb_dim), jnp.float32)
        for v in ATOM_VOCABS
    ]
    params["convs"] = []
    for _ in range(num_layer):
        params["convs"].append(dict(
            bond_emb=[0.1 * jax.random.normal(next(keys), (v, emb_dim), jnp.float32)
                      for v in BOND_VOCABS],
            eps=jnp.zeros((1, 1), jnp.float32),       # GIN eps init = 0
            w1=dense(emb_dim, (emb_dim, 2 * emb_dim)),
            b1=jnp.zeros((2 * emb_dim,), jnp.float32),
            bn1=bn(2 * emb_dim),
            w2=dense(2 * emb_dim, (2 * emb_dim, emb_dim)),
            b2=jnp.zeros((emb_dim,), jnp.float32),
        ))
    params["layer_bns"] = [bn(emb_dim) for _ in range(num_layer)]
    params["vn_mlps"] = []
    for _ in range(num_layer - 1):
        params["vn_mlps"].append(dict(
            w1=dense(emb_dim, (emb_dim, 2 * emb_dim)),
            b1=jnp.zeros((2 * emb_dim,), jnp.float32),
            bn1=bn(2 * emb_dim),
            w2=dense(2 * emb_dim, (2 * emb_dim, emb_dim)),
            b2=jnp.zeros((emb_dim,), jnp.float32),
            bn2=bn(emb_dim),
        ))
    params["pred_w"] = dense(emb_dim, (emb_dim, num_tasks))
    params["pred_b"] = jnp.zeros((num_tasks,), jnp.float32)
    return params


# ----------------------------------------------------------------------------
# One-time parameter packing: pad to lane-dense shapes, fold BN, cast to bf16,
# stack per-layer along a leading axis for the layer grid.
# ----------------------------------------------------------------------------
def pack_params(params):
    convs = params["convs"]
    vns = params["vn_mlps"]
    L = len(convs)
    bf16 = jnp.bfloat16

    packed = {
        "atom_emb": params["atom_emb"],                    # gathers stay in JAX
        "bond_emb": [cp["bond_emb"] for cp in convs],
        "eps": jnp.concatenate([cp["eps"].reshape(1) for cp in convs]),   # (L,)
    }

    packed["w1"] = _stack_pad([cp["w1"] for cp in convs], D_PAD, H_PAD, bf16)
    packed["b1"] = _stack_pad([cp["b1"].reshape(1, -1) for cp in convs], 1, H_PAD)
    bn1 = [_fold_bn(cp["bn1"]) for cp in convs]
    packed["s1"] = _stack_pad([s.reshape(1, -1) for s, _ in bn1], 1, H_PAD)
    packed["t1"] = _stack_pad([t.reshape(1, -1) for _, t in bn1], 1, H_PAD)
    packed["w2"] = _stack_pad([cp["w2"] for cp in convs], H_PAD, D_PAD, bf16)
    packed["b2"] = _stack_pad([cp["b2"].reshape(1, -1) for cp in convs], 1, D_PAD)

    bnl = [_fold_bn(bn) for bn in params["layer_bns"]]
    packed["sl"] = _stack_pad([s.reshape(1, -1) for s, _ in bnl], 1, D_PAD)
    packed["tl"] = _stack_pad([t.reshape(1, -1) for _, t in bnl], 1, D_PAD)

    packed["vw1"] = _stack_pad([vp["w1"] for vp in vns], D_PAD, H_PAD, bf16, total=L)
    packed["vb1"] = _stack_pad([vp["b1"].reshape(1, -1) for vp in vns], 1, H_PAD, total=L)
    vbn1 = [_fold_bn(vp["bn1"]) for vp in vns]
    packed["vs1"] = _stack_pad([s.reshape(1, -1) for s, _ in vbn1], 1, H_PAD, total=L)
    packed["vt1"] = _stack_pad([t.reshape(1, -1) for _, t in vbn1], 1, H_PAD, total=L)
    packed["vw2"] = _stack_pad([vp["w2"] for vp in vns], H_PAD, D_PAD, bf16, total=L)
    packed["vb2"] = _stack_pad([vp["b2"].reshape(1, -1) for vp in vns], 1, D_PAD, total=L)
    vbn2 = [_fold_bn(vp["bn2"]) for vp in vns]
    packed["vs2"] = _stack_pad([s.reshape(1, -1) for s, _ in vbn2], 1, D_PAD, total=L)
    packed["vt2"] = _stack_pad([t.reshape(1, -1) for _, t in vbn2], 1, D_PAD, total=L)

    packed["pw"] = _pad2(params["pred_w"], D_PAD, T_PAD).astype(bf16)
    packed["pb"] = _pad2(params["pred_b"].reshape(1, -1), 1, T_PAD)
    return packed


# ----------------------------------------------------------------------------
# Forward pass (GNN_node_Virtualnode, gin, JK='last', residual=False,
#               graph_pooling='mean', eval mode)
# ----------------------------------------------------------------------------
@functools.partial(jax.jit, static_argnames=("num_graphs",))
def gnn_forward(packed, node_feat, edge_feat, src, dst, batch, num_graphs):
    N = node_feat.shape[0]
    E = edge_feat.shape[0]
    G = num_graphs
    L = packed["w1"].shape[0]
    f32, bf16 = jnp.float32, jnp.bfloat16

    Np = _round_up(N, 8)
    Ep = _round_up(E, 8)
    Gp = _round_up(G, 8)

    # structure matrices (built once, zero-padded; exact in bf16)
    src_oh = _pad2(jax.nn.one_hot(src, Np, dtype=f32), Ep, Np).astype(bf16)    # [Ep,Np]
    dstT_oh = _pad2(jax.nn.one_hot(dst, Np, dtype=f32).T, Np, Ep).astype(bf16) # [Np,Ep]
    n2g_f32 = _pad2(jax.nn.one_hot(batch, Gp, dtype=f32), Np, Gp)              # [Np,Gp]
    n2g = n2g_f32.astype(bf16)
    pool = n2g_f32.T.astype(bf16)                                              # [Gp,Np]
    counts = n2g_f32.sum(axis=0).reshape(Gp, 1)
    invc = 1.0 / jnp.maximum(counts, 1.0)              # guard empty/padded graphs

    # AtomEncoder (embedding gathers kept in JAX — no Pallas gather needed)
    h0 = sum(jnp.take(tab, node_feat[:, k], axis=0)
             for k, tab in enumerate(packed["atom_emb"]))
    h0 = _pad2(h0, Np, D_PAD)

    # BondEncoder per layer, stacked [L, Ep, D_PAD]
    ee_all = jnp.stack([
        _pad2(sum(jnp.take(tab, edge_feat[:, k], axis=0)
                  for k, tab in enumerate(packed["bond_emb"][l])), Ep, D_PAD)
        for l in range(L)])

    out = _fused_gnn(packed["eps"], h0, src_oh, dstT_oh, n2g, pool, invc, ee_all,
                     packed["w1"], packed["b1"], packed["s1"], packed["t1"],
                     packed["w2"], packed["b2"], packed["sl"], packed["tl"],
                     packed["vw1"], packed["vb1"], packed["vs1"], packed["vt1"],
                     packed["vw2"], packed["vb2"], packed["vs2"], packed["vt2"],
                     packed["pw"], packed["pb"])
    return out[:G, :NUM_TASKS]


# ----------------------------------------------------------------------------
if __name__ == "__main__":
    key = jax.random.PRNGKey(0)
    k_params, k_nodes, k_edges = jax.random.split(key, 3)

    # Small batched graph: graph0 = nodes 0..6, graph1 = nodes 7..11.
    pairs = [(0, 1), (1, 2), (2, 3), (3, 4), (4, 5), (5, 6), (6, 0), (1, 4),
             (7, 8), (8, 9), (9, 10), (10, 11), (11, 7)]
    edges = []
    for a, b in pairs:
        edges += [(a, b), (b, a)]                        # both directions
    src = jnp.array([e[0] for e in edges], jnp.int32)    # [26]
    dst = jnp.array([e[1] for e in edges], jnp.int32)    # [26]
    batch = jnp.array([0] * 7 + [1] * 5, jnp.int32)      # [12]
    num_graphs = 2
    N, E = batch.shape[0], src.shape[0]

    node_feat = jnp.stack(
        [jax.random.randint(jax.random.fold_in(k_nodes, k), (N,), 0, v)
         for k, v in enumerate(ATOM_VOCABS)], axis=1).astype(jnp.int32)   # [12, 2]
    edge_feat = jnp.stack(
        [jax.random.randint(jax.random.fold_in(k_edges, k), (E,), 0, v)
         for k, v in enumerate(BOND_VOCABS)], axis=1).astype(jnp.int32)   # [26, 2]

    params = init_params(k_params)
    packed = pack_params(params)

    out = gnn_forward(packed, node_feat, edge_feat, src, dst, batch, num_graphs)
    out = jax.block_until_ready(out)
    assert out.shape == (num_graphs, NUM_TASKS), out.shape
    assert bool(jnp.all(jnp.isfinite(out)))
    print("KERNEL_OK")
</pallas_src>

<mosaic_0001>
module attributes {stable_mosaic.version = 11 : i64} {
  func.func @_fused_gnn_kernel(%arg0: i32, %arg1: memref<5xf32, #tpu.memory_space<smem>>, %arg2: memref<16x128xf32, #tpu.memory_space<vmem>>, %arg3: memref<32x16xbf16, #tpu.memory_space<vmem>>, %arg4: memref<16x32xbf16, #tpu.memory_space<vmem>>, %arg5: memref<16x8xbf16, #tpu.memory_space<vmem>>, %arg6: memref<8x16xbf16, #tpu.memory_space<vmem>>, %arg7: memref<8x1xf32, #tpu.memory_space<vmem>>, %arg8: memref<1x32x128xf32, #tpu.memory_space<vmem>>, %arg9: memref<1x128x128xbf16, #tpu.memory_space<vmem>>, %arg10: memref<1x1x128xf32, #tpu.memory_space<vmem>>, %arg11: memref<1x1x128xf32, #tpu.memory_space<vmem>>, %arg12: memref<1x1x128xf32, #tpu.memory_space<vmem>>, %arg13: memref<1x128x128xbf16, #tpu.memory_space<vmem>>, %arg14: memref<1x1x128xf32, #tpu.memory_space<vmem>>, %arg15: memref<1x1x128xf32, #tpu.memory_space<vmem>>, %arg16: memref<1x1x128xf32, #tpu.memory_space<vmem>>, %arg17: memref<1x128x128xbf16, #tpu.memory_space<vmem>>, %arg18: memref<1x1x128xf32, #tpu.memory_space<vmem>>, %arg19: memref<1x1x128xf32, #tpu.memory_space<vmem>>, %arg20: memref<1x1x128xf32, #tpu.memory_space<vmem>>, %arg21: memref<1x128x128xbf16, #tpu.memory_space<vmem>>, %arg22: memref<1x1x128xf32, #tpu.memory_space<vmem>>, %arg23: memref<1x1x128xf32, #tpu.memory_space<vmem>>, %arg24: memref<1x1x128xf32, #tpu.memory_space<vmem>>, %arg25: memref<128x128xbf16, #tpu.memory_space<vmem>>, %arg26: memref<1x128xf32, #tpu.memory_space<vmem>>, %arg27: memref<8x128xf32, #tpu.memory_space<vmem>>, %arg28: memref<16x128xf32, #tpu.memory_space<vmem>>, %arg29: memref<8x128xf32, #tpu.memory_space<vmem>>) attributes {dimension_semantics = [#tpu.dimension_semantics<arbitrary>], iteration_bounds = array<i64: 5>, scalar_prefetch = 0 : i64, scratch_operands = 2 : i64, tpu.core_type = #tpu.core_type<tc>, window_params = [{transform_indices = @transform_0, window_bounds = array<i64: 5>}, {pipeline_mode = #tpu.pipeline_mode<synchronous>, transform_indices = @transform_1, window_bounds = array<i64: 16, 128>}, {pipeline_mode = #tpu.pipeline_mode<synchronous>, transform_indices = @transform_2, window_bounds = array<i64: 32, 16>}, {pipeline_mode = #tpu.pipeline_mode<synchronous>, transform_indices = @transform_3, window_bounds = array<i64: 16, 32>}, {pipeline_mode = #tpu.pipeline_mode<synchronous>, transform_indices = @transform_4, window_bounds = array<i64: 16, 8>}, {pipeline_mode = #tpu.pipeline_mode<synchronous>, transform_indices = @transform_5, window_bounds = array<i64: 8, 16>}, {pipeline_mode = #tpu.pipeline_mode<synchronous>, transform_indices = @transform_6, window_bounds = array<i64: 8, 1>}, {transform_indices = @transform_7, window_bounds = array<i64: 1, 32, 128>}, {transform_indices = @transform_8, window_bounds = array<i64: 1, 128, 128>}, {transform_indices = @transform_9, window_bounds = array<i64: 1, 1, 128>}, {transform_indices = @transform_10, window_bounds = array<i64: 1, 1, 128>}, {transform_indices = @transform_11, window_bounds = array<i64: 1, 1, 128>}, {transform_indices = @transform_12, window_bounds = array<i64: 1, 128, 128>}, {transform_indices = @transform_13, window_bounds = array<i64: 1, 1, 128>}, {transform_indices = @transform_14, window_bounds = array<i64: 1, 1, 128>}, {transform_indices = @transform_15, window_bounds = array<i64: 1, 1, 128>}, {transform_indices = @transform_16, window_bounds = array<i64: 1, 128, 128>}, {transform_indices = @transform_17, window_bounds = array<i64: 1, 1, 128>}, {transform_indices = @transform_18, window_bounds = array<i64: 1, 1, 128>}, {transform_indices = @transform_19, window_bounds = array<i64: 1, 1, 128>}, {transform_indices = @transform_20, window_bounds = array<i64: 1, 128, 128>}, {transform_indices = @transform_21, window_bounds = array<i64: 1, 1, 128>}, {transform_indices = @transform_22, window_bounds = array<i64: 1, 1, 128>}, {transform_indices = @transform_23, window_bounds = array<i64: 1, 1, 128>}, {pipeline_mode = #tpu.pipeline_mode<synchronous>, transform_indices = @transform_24, window_bounds = array<i64: 128, 128>}, {pipeline_mode = #tpu.pipeline_mode<synchronous>, transform_indices = @transform_25, window_bounds = array<i64: 1, 128>}, {pipeline_mode = #tpu.pipeline_mode<synchronous>, transform_indices = @transform_26, window_bounds = array<i64: 8, 128>}]} {
    %c0_i32 = arith.constant 0 : i32
    %0 = arith.cmpi eq, %arg0, %c0_i32 : i32
    %1 = arith.extui %0 : i1 to i32
    %c0_i32_0 = arith.constant 0 : i32
    %2 = arith.cmpi ne, %1, %c0_i32_0 : i32
    scf.if %2 {
      %c0_49 = arith.constant 0 : index
      %c0_50 = arith.constant 0 : index
      %69 = vector.load %arg2[%c0_49, %c0_50] : memref<16x128xf32, #tpu.memory_space<vmem>>, vector<16x128xf32>
      %c0_51 = arith.constant 0 : index
      %c0_52 = arith.constant 0 : index
      %70 = vector.load %arg28[%c0_51, %c0_52] : memref<16x128xf32, #tpu.memory_space<vmem>>, vector<16x128xf32>
      tpu.vector_store %arg28[%c0_51, %c0_52], %69 {strides = array<i32>} : memref<16x128xf32, #tpu.memory_space<vmem>>, vector<16x128xf32>,
      %cst_53 = arith.constant 0.000000e+00 : f32
      %71 = vector.broadcast %cst_53 : f32 to vector<8x128xf32>
      %c0_54 = arith.constant 0 : index
      %c0_55 = arith.constant 0 : index
      %72 = vector.load %arg29[%c0_54, %c0_55] : memref<8x128xf32, #tpu.memory_space<vmem>>, vector<8x128xf32>
      tpu.vector_store %arg29[%c0_54, %c0_55], %71 {strides = array<i32>} : memref<8x128xf32, #tpu.memory_space<vmem>>, vector<8x128xf32>,
    } else {
    }
    %c0 = arith.constant 0 : index
    %c0_1 = arith.constant 0 : index
    %3 = vector.load %arg29[%c0, %c0_1] : memref<8x128xf32, #tpu.memory_space<vmem>>, vector<8x128xf32>
    %c0_2 = arith.constant 0 : index
    %c0_3 = arith.constant 0 : index
    %4 = vector.load %arg28[%c0_2, %c0_3] : memref<16x128xf32, #tpu.memory_space<vmem>>, vector<16x128xf32>
    %c0_4 = arith.constant 0 : index
    %c0_5 = arith.constant 0 : index
    %5 = vector.load %arg5[%c0_4, %c0_5] : memref<16x8xbf16, #tpu.memory_space<vmem>>, vector<16x8xbf16>
    %6 = arith.truncf %3 : vector<8x128xf32> to vector<8x128xbf16>
    %cst = arith.constant dense<0.000000e+00> : vector<16x128xf32>
    %7 = tpu.matmul %5, %6, %cst {dimension_numbers = #tpu.dot_dimension_numbers<[1], [0], [0], [1], [0, 0, 1, 1], [], []>} : vector<16x8xbf16>, vector<8x128xbf16>, vector<16x128xf32> -> vector<16x128xf32>
    %8 = arith.addf %4, %7 : vector<16x128xf32>
    %9 = arith.truncf %8 : vector<16x128xf32> to vector<16x128xbf16>
    %c4_i32 = arith.constant 4 : i32
    %10 = arith.cmpi slt, %arg0, %c4_i32 : i32
    %11 = arith.extui %10 : i1 to i32
    %c0_i32_6 = arith.constant 0 : i32
    %12 = arith.cmpi ne, %11, %c0_i32_6 : i32
    scf.if %12 {
      %c0_49 = arith.constant 0 : index
      %c0_50 = arith.constant 0 : index
      %69 = vector.load %arg6[%c0_49, %c0_50] : memref<8x16xbf16, #tpu.memory_space<vmem>>, vector<8x16xbf16>
      %cst_51 = arith.constant dense<0.000000e+00> : vector<8x128xf32>
      %70 = tpu.matmul %69, %9, %cst_51 {dimension_numbers = #tpu.dot_dimension_numbers<[1], [0], [0], [1], [0, 0, 1, 1], [], []>} : vector<8x16xbf16>, vector<16x128xbf16>, vector<8x128xf32> -> vector<8x128xf32>
      %71 = arith.addf %70, %3 : vector<8x128xf32>
      %72 = arith.truncf %71 : vector<8x128xf32> to vector<8x128xbf16>
      %c0_52 = arith.constant 0 : index
      %c0_53 = arith.constant 0 : index
      %c0_54 = arith.constant 0 : index
      %73 = vector.load %arg17[%c0_52, %c0_53, %c0_54] : memref<1x128x128xbf16, #tpu.memory_space<vmem>>, vector<1x128x128xbf16>
      %74 = vector.shape_cast %73 : vector<1x128x128xbf16> to vector<128x128xbf16>
      %cst_55 = arith.constant dense<0.000000e+00> : vector<8x128xf32>
      %75 = tpu.matmul %72, %74, %cst_55 {dimension_numbers = #tpu.dot_dimension_numbers<[1], [0], [0], [1], [0, 0, 1, 1], [], []>} : vector<8x128xbf16>, vector<128x128xbf16>, vector<8x128xf32> -> vector<8x128xf32>
      %c0_56 = arith.constant 0 : index
      %c0_57 = arith.constant 0 : index
      %c0_58 = arith.constant 0 : index
      %76 = vector.load %arg18[%c0_56, %c0_57, %c0_58] : memref<1x1x128xf32, #tpu.memory_space<vmem>>, vector<1x1x128xf32>
      %77 = vector.shape_cast %76 : vector<1x1x128xf32> to vector<1x128xf32>
      %78 = vector.broadcast %77 : vector<1x128xf32> to vector<8x128xf32>
      %79 = arith.addf %75, %78 : vector<8x128xf32>
      %c0_59 = arith.constant 0 : index
      %c0_60 = arith.constant 0 : index
      %c0_61 = arith.constant 0 : index
      %80 = vector.load %arg19[%c0_59, %c0_60, %c0_61] : memref<1x1x128xf32, #tpu.memory_space<vmem>>, vector<1x1x128xf32>
      %81 = vector.shape_cast %80 : vector<1x1x128xf32> to vector<1x128xf32>
      %82 = vector.broadcast %81 : vector<1x128xf32> to vector<8x128xf32>
      %83 = arith.mulf %79, %82 : vector<8x128xf32>
      %c0_62 = arith.constant 0 : index
      %c0_63 = arith.constant 0 : index
      %c0_64 = arith.constant 0 : index
      %84 = vector.load %arg20[%c0_62, %c0_63, %c0_64] : memref<1x1x128xf32, #tpu.memory_space<vmem>>, vector<1x1x128xf32>
      %85 = vector.shape_cast %84 : vector<1x1x128xf32> to vector<1x128xf32>
      %86 = vector.broadcast %85 : vector<1x128xf32> to vector<8x128xf32>
      %87 = arith.addf %83, %86 : vector<8x128xf32>
      %cst_65 = arith.constant 0.000000e+00 : f32
      %88 = vector.broadcast %cst_65 : f32 to vector<8x128xf32>
      %89 = arith.maximumf %87, %88 : vector<8x128xf32>
      %90 = arith.truncf %89 : vector<8x128xf32> to vector<8x128xbf16>
      %c0_66 = arith.constant 0 : index
      %c0_67 = arith.constant 0 : index
      %c0_68 = arith.constant 0 : index
      %91 = vector.load %arg21[%c0_66, %c0_67, %c0_68] : memref<1x128x128xbf16, #tpu.memory_space<vmem>>, vector<1x128x128xbf16>
      %92 = vector.shape_cast %91 : vector<1x128x128xbf16> to vector<128x128xbf16>
      %cst_69 = arith.constant dense<0.000000e+00> : vector<8x128xf32>
      %93 = tpu.matmul %90, %92, %cst_69 {dimension_numbers = #tpu.dot_dimension_numbers<[1], [0], [0], [1], [0, 0, 1, 1], [], []>} : vector<8x128xbf16>, vector<128x128xbf16>, vector<8x128xf32> -> vector<8x128xf32>
      %c0_70 = arith.constant 0 : index
      %c0_71 = arith.constant 0 : index
      %c0_72 = arith.constant 0 : index
      %94 = vector.load %arg22[%c0_70, %c0_71, %c0_72] : memref<1x1x128xf32, #tpu.memory_space<vmem>>, vector<1x1x128xf32>
      %95 = vector.shape_cast %94 : vector<1x1x128xf32> to vector<1x128xf32>
      %96 = vector.broadcast %95 : vector<1x128xf32> to vector<8x128xf32>
      %97 = arith.addf %93, %96 : vector<8x128xf32>
      %c0_73 = arith.constant 0 : index
      %c0_74 = arith.constant 0 : index
      %c0_75 = arith.constant 0 : index
      %98 = vector.load %arg23[%c0_73, %c0_74, %c0_75] : memref<1x1x128xf32, #tpu.memory_space<vmem>>, vector<1x1x128xf32>
      %99 = vector.shape_cast %98 : vector<1x1x128xf32> to vector<1x128xf32>
      %100 = vector.broadcast %99 : vector<1x128xf32> to vector<8x128xf32>
      %101 = arith.mulf %97, %100 : vector<8x128xf32>
      %c0_76 = arith.constant 0 : index
      %c0_77 = arith.constant 0 : index
      %c0_78 = arith.constant 0 : index
      %102 = vector.load %arg24[%c0_76, %c0_77, %c0_78] : memref<1x1x128xf32, #tpu.memory_space<vmem>>, vector<1x1x128xf32>
      %103 = vector.shape_cast %102 : vector<1x1x128xf32> to vector<1x128xf32>
      %104 = vector.broadcast %103 : vector<1x128xf32> to vector<8x128xf32>
      %105 = arith.addf %101, %104 : vector<8x128xf32>
      %cst_79 = arith.constant 0.000000e+00 : f32
      %106 = vector.broadcast %cst_79 : f32 to vector<8x128xf32>
      %107 = arith.maximumf %105, %106 : vector<8x128xf32>
      %c0_80 = arith.constant 0 : index
      %c0_81 = arith.constant 0 : index
      %108 = vector.load %arg29[%c0_80, %c0_81] : memref<8x128xf32, #tpu.memory_space<vmem>>, vector<8x128xf32>
      tpu.vector_store %arg29[%c0_80, %c0_81], %107 {strides = array<i32>} : memref<8x128xf32, #tpu.memory_space<vmem>>, vector<8x128xf32>,
    } else {
    }
    %c0_7 = arith.constant 0 : index
    %c0_8 = arith.constant 0 : index
    %13 = vector.load %arg3[%c0_7, %c0_8] : memref<32x16xbf16, #tpu.memory_space<vmem>>, vector<32x16xbf16>
    %cst_9 = arith.constant dense<0.000000e+00> : vector<32x128xf32>
    %14 = tpu.matmul %13, %9, %cst_9 {dimension_numbers = #tpu.dot_dimension_numbers<[1], [0], [0], [1], [0, 0, 1, 1], [], []>} : vector<32x16xbf16>, vector<16x128xbf16>, vector<32x128xf32> -> vector<32x128xf32>
    %c0_10 = arith.constant 0 : index
    %c0_11 = arith.constant 0 : index
    %c0_12 = arith.constant 0 : index
    %15 = vector.load %arg8[%c0_10, %c0_11, %c0_12] : memref<1x32x128xf32, #tpu.memory_space<vmem>>, vector<1x32x128xf32>
    %16 = vector.shape_cast %15 : vector<1x32x128xf32> to vector<32x128xf32>
    %17 = arith.addf %14, %16 : vector<32x128xf32>
    %cst_13 = arith.constant 0.000000e+00 : f32
    %18 = vector.broadcast %cst_13 : f32 to vector<32x128xf32>
    %19 = arith.maximumf %17, %18 : vector<32x128xf32>
    %c0_14 = arith.constant 0 : index
    %c0_15 = arith.constant 0 : index
    %20 = vector.load %arg4[%c0_14, %c0_15] : memref<16x32xbf16, #tpu.memory_space<vmem>>, vector<16x32xbf16>
    %21 = arith.truncf %19 : vector<32x128xf32> to vector<32x128xbf16>
    %cst_16 = arith.constant dense<0.000000e+00> : vector<16x128xf32>
    %22 = tpu.matmul %20, %21, %cst_16 {dimension_numbers = #tpu.dot_dimension_numbers<[1], [0], [0], [1], [0, 0, 1, 1], [], []>} : vector<16x32xbf16>, vector<32x128xbf16>, vector<16x128xf32> -> vector<16x128xf32>
    %23 = arith.index_cast %arg0 : i32 to index
    %24 = memref.load %arg1[%23] : memref<5xf32, #tpu.memory_space<smem>>
    %cst_17 = arith.constant 1.000000e+00 : f32
    %25 = arith.addf %cst_17, %24 : f32
    %26 = vector.broadcast %25 : f32 to vector<16x128xf32>
    %27 = arith.mulf %26, %8 : vector<16x128xf32>
    %28 = arith.addf %27, %22 : vector<16x128xf32>
    %29 = arith.truncf %28 : vector<16x128xf32> to vector<16x128xbf16>
    %c0_18 = arith.constant 0 : index
    %c0_19 = arith.constant 0 : index
    %c0_20 = arith.constant 0 : index
    %30 = vector.load %arg9[%c0_18, %c0_19, %c0_20] : memref<1x128x128xbf16, #tpu.memory_space<vmem>>, vector<1x128x128xbf16>
    %31 = vector.shape_cast %30 : vector<1x128x128xbf16> to vector<128x128xbf16>
    %cst_21 = arith.constant dense<0.000000e+00> : vector<16x128xf32>
    %32 = tpu.matmul %29, %31, %cst_21 {dimension_numbers = #tpu.dot_dimension_numbers<[1], [0], [0], [1], [0, 0, 1, 1], [], []>} : vector<16x128xbf16>, vector<128x128xbf16>, vector<16x128xf32> -> vector<16x128xf32>
    %c0_22 = arith.constant 0 : index
    %c0_23 = arith.constant 0 : index
    %c0_24 = arith.constant 0 : index
    %33 = vector.load %arg10[%c0_22, %c0_23, %c0_24] : memref<1x1x128xf32, #tpu.memory_space<vmem>>, vector<1x1x128xf32>
    %34 = vector.shape_cast %33 : vector<1x1x128xf32> to vector<1x128xf32>
    %35 = vector.broadcast %34 : vector<1x128xf32> to vector<16x128xf32>
    %36 = arith.addf %32, %35 : vector<16x128xf32>
    %c0_25 = arith.constant 0 : index
    %c0_26 = arith.constant 0 : index
    %c0_27 = arith.constant 0 : index
    %37 = vector.load %arg11[%c0_25, %c0_26, %c0_27] : memref<1x1x128xf32, #tpu.memory_space<vmem>>, vector<1x1x128xf32>
    %38 = vector.shape_cast %37 : vector<1x1x128xf32> to vector<1x128xf32>
    %39 = vector.broadcast %38 : vector<1x128xf32> to vector<16x128xf32>
    %40 = arith.mulf %36, %39 : vector<16x128xf32>
    %c0_28 = arith.constant 0 : index
    %c0_29 = arith.constant 0 : index
    %c0_30 = arith.constant 0 : index
    %41 = vector.load %arg12[%c0_28, %c0_29, %c0_30] : memref<1x1x128xf32, #tpu.memory_space<vmem>>, vector<1x1x128xf32>
    %42 = vector.shape_cast %41 : vector<1x1x128xf32> to vector<1x128xf32>
    %43 = vector.broadcast %42 : vector<1x128xf32> to vector<16x128xf32>
    %44 = arith.addf %40, %43 : vector<16x128xf32>
    %cst_31 = arith.constant 0.000000e+00 : f32
    %45 = vector.broadcast %cst_31 : f32 to vector<16x128xf32>
    %46 = arith.maximumf %44, %45 : vector<16x128xf32>
    %47 = arith.truncf %46 : vector<16x128xf32> to vector<16x128xbf16>
    %c0_32 = arith.constant 0 : index
    %c0_33 = arith.constant 0 : index
    %c0_34 = arith.constant 0 : index
    %48 = vector.load %arg13[%c0_32, %c0_33, %c0_34] : memref<1x128x128xbf16, #tpu.memory_space<vmem>>, vector<1x128x128xbf16>
    %49 = vector.shape_cast %48 : vector<1x128x128xbf16> to vector<128x128xbf16>
    %cst_35 = arith.constant dense<0.000000e+00> : vector<16x128xf32>
    %50 = tpu.matmul %47, %49, %cst_35 {dimension_numbers = #tpu.dot_dimension_numbers<[1], [0], [0], [1], [0, 0, 1, 1], [], []>} : vector<16x128xbf16>, vector<128x128xbf16>, vector<16x128xf32> -> vector<16x128xf32>
    %c0_36 = arith.constant 0 : index
    %c0_37 = arith.constant 0 : index
    %c0_38 = arith.constant 0 : index
    %51 = vector.load %arg14[%c0_36, %c0_37, %c0_38] : memref<1x1x128xf32, #tpu.memory_space<vmem>>, vector<1x1x128xf32>
    %52 = vector.shape_cast %51 : vector<1x1x128xf32> to vector<1x128xf32>
    %53 = vector.broadcast %52 : vector<1x128xf32> to vector<16x128xf32>
    %54 = arith.addf %50, %53 : vector<16x128xf32>
    %c0_39 = arith.constant 0 : index
    %c0_40 = arith.constant 0 : index
    %c0_41 = arith.constant 0 : index
    %55 = vector.load %arg15[%c0_39, %c0_40, %c0_41] : memref<1x1x128xf32, #tpu.memory_space<vmem>>, vector<1x1x128xf32>
    %56 = vector.shape_cast %55 : vector<1x1x128xf32> to vector<1x128xf32>
    %57 = vector.broadcast %56 : vector<1x128xf32> to vector<16x128xf32>
    %58 = arith.mulf %54, %57 : vector<16x128xf32>
    %c0_42 = arith.constant 0 : index
    %c0_43 = arith.constant 0 : index
    %c0_44 = arith.constant 0 : index
    %59 = vector.load %arg16[%c0_42, %c0_43, %c0_44] : memref<1x1x128xf32, #tpu.memory_space<vmem>>, vector<1x1x128xf32>
    %60 = vector.shape_cast %59 : vector<1x1x128xf32> to vector<1x128xf32>
    %61 = vector.broadcast %60 : vector<1x128xf32> to vector<16x128xf32>
    %62 = arith.addf %58, %61 : vector<16x128xf32>
    %c4_i32_45 = arith.constant 4 : i32
    %63 = arith.cmpi ne, %arg0, %c4_i32_45 : i32
    %64 = arith.extui %63 : i1 to i32
    %c0_i32_46 = arith.constant 0 : i32
    %65 = arith.cmpi ne, %64, %c0_i32_46 : i32
    scf.if %65 {
      %cst_49 = arith.constant 0.000000e+00 : f32
      %69 = vector.broadcast %cst_49 : f32 to vector<16x128xf32>
      %70 = arith.maximumf %62, %69 : vector<16x128xf32>
      %c0_50 = arith.constant 0 : index
      %c0_51 = arith.constant 0 : index
      %71 = vector.load %arg28[%c0_50, %c0_51] : memref<16x128xf32, #tpu.memory_space<vmem>>, vector<16x128xf32>
      tpu.vector_store %arg28[%c0_50, %c0_51], %70 {strides = array<i32>} : memref<16x128xf32, #tpu.memory_space<vmem>>, vector<16x128xf32>,
    } else {
    }
    %c4_i32_47 = arith.constant 4 : i32
    %66 = arith.cmpi eq, %arg0, %c4_i32_47 : i32
    %67 = arith.extui %66 : i1 to i32
    %c0_i32_48 = arith.constant 0 : i32
    %68 = arith.cmpi ne, %67, %c0_i32_48 : i32
    scf.if %68 {
      %c0_49 = arith.constant 0 : index
      %c0_50 = arith.constant 0 : index
      %69 = vector.load %arg6[%c0_49, %c0_50] : memref<8x16xbf16, #tpu.memory_space<vmem>>, vector<8x16xbf16>
      %70 = arith.truncf %62 : vector<16x128xf32> to vector<16x128xbf16>
      %cst_51 = arith.constant dense<0.000000e+00> : vector<8x128xf32>
      %71 = tpu.matmul %69, %70, %cst_51 {dimension_numbers = #tpu.dot_dimension_numbers<[1], [0], [0], [1], [0, 0, 1, 1], [], []>} : vector<8x16xbf16>, vector<16x128xbf16>, vector<8x128xf32> -> vector<8x128xf32>
      %c0_52 = arith.constant 0 : index
      %c0_53 = arith.constant 0 : index
      %72 = vector.load %arg7[%c0_52, %c0_53] : memref<8x1xf32, #tpu.memory_space<vmem>>, vector<8x1xf32>
      %73 = vector.broadcast %72 : vector<8x1xf32> to vector<8x128xf32>
      %74 = arith.mulf %71, %73 : vector<8x128xf32>
      %75 = arith.truncf %74 : vector<8x128xf32> to vector<8x128xbf16>
      %c0_54 = arith.constant 0 : index
      %c0_55 = arith.constant 0 : index
      %76 = vector.load %arg25[%c0_54, %c0_55] : memref<128x128xbf16, #tpu.memory_space<vmem>>, vector<128x128xbf16>
      %cst_56 = arith.constant dense<0.000000e+00> : vector<8x128xf32>
      %77 = tpu.matmul %75, %76, %cst_56 {dimension_numbers = #tpu.dot_dimension_numbers<[1], [0], [0], [1], [0, 0, 1, 1], [], []>} : vector<8x128xbf16>, vector<128x128xbf16>, vector<8x128xf32> -> vector<8x128xf32>
      %c0_57 = arith.constant 0 : index
      %c0_58 = arith.constant 0 : index
      %78 = vector.load %arg26[%c0_57, %c0_58] : memref<1x128xf32, #tpu.memory_space<vmem>>, vector<1x128xf32>
      %79 = vector.broadcast %78 : vector<1x128xf32> to vector<8x128xf32>
      %80 = arith.addf %77, %79 : vector<8x128xf32>
      %c0_59 = arith.constant 0 : index
      %c0_60 = arith.constant 0 : index
      %81 = vector.load %arg27[%c0_59, %c0_60] : memref<8x128xf32, #tpu.memory_space<vmem>>, vector<8x128xf32>
      tpu.vector_store %arg27[%c0_59, %c0_60], %80 {strides = array<i32>} : memref<8x128xf32, #tpu.memory_space<vmem>>, vector<8x128xf32>,
    } else {
    }
    return
  }
  func.func @transform_0(%arg0: i32) -> i32 {
    %c0_i32 = arith.constant 0 : i32
    %c0_i32_0 = arith.constant 0 : i32
    return %c0_i32 : i32
  }
  func.func @transform_1(%arg0: i32) -> (i32, i32) {
    %c0_i32 = arith.constant 0 : i32
    %c0_i32_0 = arith.constant 0 : i32
    %c0_i32_1 = arith.constant 0 : i32
    return %c0_i32, %c0_i32_0 : i32, i32
  }
  func.func @transform_2(%arg0: i32) -> (i32, i32) {
    %c0_i32 = arith.constant 0 : i32
    %c0_i32_0 = arith.constant 0 : i32
    %c0_i32_1 = arith.constant 0 : i32
    return %c0_i32, %c0_i32_0 : i32, i32
  }
  func.func @transform_3(%arg0: i32) -> (i32, i32) {
    %c0_i32 = arith.constant 0 : i32
    %c0_i32_0 = arith.constant 0 : i32
    %c0_i32_1 = arith.constant 0 : i32
    return %c0_i32, %c0_i32_0 : i32, i32
  }
  func.func @transform_4(%arg0: i32) -> (i32, i32) {
    %c0_i32 = arith.constant 0 : i32
    %c0_i32_0 = arith.constant 0 : i32
    %c0_i32_1 = arith.constant 0 : i32
    return %c0_i32, %c0_i32_0 : i32, i32
  }
  func.func @transform_5(%arg0: i32) -> (i32, i32) {
    %c0_i32 = arith.constant 0 : i32
    %c0_i32_0 = arith.constant 0 : i32
    %c0_i32_1 = arith.constant 0 : i32
    return %c0_i32, %c0_i32_0 : i32, i32
  }
  func.func @transform_6(%arg0: i32) -> (i32, i32) {
    %c0_i32 = arith.constant 0 : i32
    %c0_i32_0 = arith.constant 0 : i32
    %c0_i32_1 = arith.constant 0 : i32
    return %c0_i32, %c0_i32_0 : i32, i32
  }
  func.func @transform_7(%arg0: i32) -> (i32, i32, i32) {
    %c0_i32 = arith.constant 0 : i32
    %c0_i32_0 = arith.constant 0 : i32
    %c0_i32_1 = arith.constant 0 : i32
    return %arg0, %c0_i32, %c0_i32_0 : i32, i32, i32
  }
  func.func @transform_8(%arg0: i32) -> (i32, i32, i32) {
    %c0_i32 = arith.constant 0 : i32
    %c0_i32_0 = arith.constant 0 : i32
    %c0_i32_1 = arith.constant 0 : i32
    return %arg0, %c0_i32, %c0_i32_0 : i32, i32, i32
  }
  func.func @transform_9(%arg0: i32) -> (i32, i32, i32) {
    %c0_i32 = arith.constant 0 : i32
    %c0_i32_0 = arith.constant 0 : i32
    %c0_i32_1 = arith.constant 0 : i32
    return %arg0, %c0_i32, %c0_i32_0 : i32, i32, i32
  }
  func.func @transform_10(%arg0: i32) -> (i32, i32, i32) {
    %c0_i32 = arith.constant 0 : i32
    %c0_i32_0 = arith.constant 0 : i32
    %c0_i32_1 = arith.constant 0 : i32
    return %arg0, %c0_i32, %c0_i32_0 : i32, i32, i32
  }
  func.func @transform_11(%arg0: i32) -> (i32, i32, i32) {
    %c0_i32 = arith.constant 0 : i32
    %c0_i32_0 = arith.constant 0 : i32
    %c0_i32_1 = arith.constant 0 : i32
    return %arg0, %c0_i32, %c0_i32_0 : i32, i32, i32
  }
  func.func @transform_12(%arg0: i32) -> (i32, i32, i32) {
    %c0_i32 = arith.constant 0 : i32
    %c0_i32_0 = arith.constant 0 : i32
    %c0_i32_1 = arith.constant 0 : i32
    return %arg0, %c0_i32, %c0_i32_0 : i32, i32, i32
  }
  func.func @transform_13(%arg0: i32) -> (i32, i32, i32) {
    %c0_i32 = arith.constant 0 : i32
    %c0_i32_0 = arith.constant 0 : i32
    %c0_i32_1 = arith.constant 0 : i32
    return %arg0, %c0_i32, %c0_i32_0 : i32, i32, i32
  }
  func.func @transform_14(%arg0: i32) -> (i32, i32, i32) {
    %c0_i32 = arith.constant 0 : i32
    %c0_i32_0 = arith.constant 0 : i32
    %c0_i32_1 = arith.constant 0 : i32
    return %arg0, %c0_i32, %c0_i32_0 : i32, i32, i32
  }
  func.func @transform_15(%arg0: i32) -> (i32, i32, i32) {
    %c0_i32 = arith.constant 0 : i32
    %c0_i32_0 = arith.constant 0 : i32
    %c0_i32_1 = arith.constant 0 : i32
    return %arg0, %c0_i32, %c0_i32_0 : i32, i32, i32
  }
  func.func @transform_16(%arg0: i32) -> (i32, i32, i32) {
    %c0_i32 = arith.constant 0 : i32
    %c0_i32_0 = arith.constant 0 : i32
    %c0_i32_1 = arith.constant 0 : i32
    return %arg0, %c0_i32, %c0_i32_0 : i32, i32, i32
  }
  func.func @transform_17(%arg0: i32) -> (i32, i32, i32) {
    %c0_i32 = arith.constant 0 : i32
    %c0_i32_0 = arith.constant 0 : i32
    %c0_i32_1 = arith.constant 0 : i32
    return %arg0, %c0_i32, %c0_i32_0 : i32, i32, i32
  }
  func.func @transform_18(%arg0: i32) -> (i32, i32, i32) {
    %c0_i32 = arith.constant 0 : i32
    %c0_i32_0 = arith.constant 0 : i32
    %c0_i32_1 = arith.constant 0 : i32
    return %arg0, %c0_i32, %c0_i32_0 : i32, i32, i32
  }
  func.func @transform_19(%arg0: i32) -> (i32, i32, i32) {
    %c0_i32 = arith.constant 0 : i32
    %c0_i32_0 = arith.constant 0 : i32
    %c0_i32_1 = arith.constant 0 : i32
    return %arg0, %c0_i32, %c0_i32_0 : i32, i32, i32
  }
  func.func @transform_20(%arg0: i32) -> (i32, i32, i32) {
    %c0_i32 = arith.constant 0 : i32
    %c0_i32_0 = arith.constant 0 : i32
    %c0_i32_1 = arith.constant 0 : i32
    return %arg0, %c0_i32, %c0_i32_0 : i32, i32, i32
  }
  func.func @transform_21(%arg0: i32) -> (i32, i32, i32) {
    %c0_i32 = arith.constant 0 : i32
    %c0_i32_0 = arith.constant 0 : i32
    %c0_i32_1 = arith.constant 0 : i32
    return %arg0, %c0_i32, %c0_i32_0 : i32, i32, i32
  }
  func.func @transform_22(%arg0: i32) -> (i32, i32, i32) {
    %c0_i32 = arith.constant 0 : i32
    %c0_i32_0 = arith.constant 0 : i32
    %c0_i32_1 = arith.constant 0 : i32
    return %arg0, %c0_i32, %c0_i32_0 : i32, i32, i32
  }
  func.func @transform_23(%arg0: i32) -> (i32, i32, i32) {
    %c0_i32 = arith.constant 0 : i32
    %c0_i32_0 = arith.constant 0 : i32
    %c0_i32_1 = arith.constant 0 : i32
    return %arg0, %c0_i32, %c0_i32_0 : i32, i32, i32
  }
  func.func @transform_24(%arg0: i32) -> (i32, i32) {
    %c0_i32 = arith.constant 0 : i32
    %c0_i32_0 = arith.constant 0 : i32
    %c0_i32_1 = arith.constant 0 : i32
    return %c0_i32, %c0_i32_0 : i32, i32
  }
  func.func @transform_25(%arg0: i32) -> (i32, i32) {
    %c0_i32 = arith.constant 0 : i32
    %c0_i32_0 = arith.constant 0 : i32
    %c0_i32_1 = arith.constant 0 : i32
    return %c0_i32, %c0_i32_0 : i32, i32
  }
  func.func @transform_26(%arg0: i32) -> (i32, i32) {
    %c0_i32 = arith.constant 0 : i32
    %c0_i32_0 = arith.constant 0 : i32
    %c0_i32_1 = arith.constant 0 : i32
    return %c0_i32, %c0_i32_0 : i32, i32
  }
}

</mosaic_0001>

<llo_original>
// kernel: gnn_forward.1
$region0: #{gnn_forward.1}
  #allocation0 [shape = 'u32[]', space=smem, size = 0x4, offset = 0x4, fixed_abs, tag = 'smem constant byte address 0x4 - core index']
  #allocation1 [shape = 'u32[144,128]{1,0:T(1,128)}', space=vmem, size = 0x12000, scoped, tag = 'internal scratch']
  #allocation2 [shape = 'f32[16,128]{1,0:T(8,128)}', space=vmem, size = 0x2000, scoped, tag = 'scratch operand']
  #allocation3 [shape = 'f32[8,128]{1,0:T(8,128)}', space=vmem, size = 0x1000, scoped, tag = 'scratch operand']
  %s0 = inlined_call_operand.vmem [shape: f32[5], index: 0, kind: input, shape index: {}]
  %s1 = inlined_call_operand.vmem [shape: f32[16,128], index: 1, kind: input, shape index: {}]
  %s2 = inlined_call_operand.vmem [shape: bf16[32,16], index: 2, kind: input, shape index: {}]
  %s3 = inlined_call_operand.vmem [shape: bf16[16,32], index: 3, kind: input, shape index: {}]
  %s4 = inlined_call_operand.vmem [shape: bf16[16,8], index: 4, kind: input, shape index: {}]
  %s5 = inlined_call_operand.vmem [shape: bf16[8,16], index: 5, kind: input, shape index: {}]
  %s6 = inlined_call_operand.vmem [shape: f32[8,1], index: 6, kind: input, shape index: {}]
  %s7 = inlined_call_operand.vmem [shape: f32[5,32,128], index: 7, kind: input, shape index: {}]
  %s8 = inlined_call_operand.vmem [shape: bf16[5,128,128], index: 8, kind: input, shape index: {}]
  %s9 = inlined_call_operand.vmem [shape: f32[5,1,128], index: 9, kind: input, shape index: {}]
  %s10 = inlined_call_operand.vmem [shape: f32[5,1,128], index: 10, kind: input, shape index: {}]
  %s11 = inlined_call_operand.vmem [shape: f32[5,1,128], index: 11, kind: input, shape index: {}]
  %s12 = inlined_call_operand.vmem [shape: bf16[5,128,128], index: 12, kind: input, shape index: {}]
  %s13 = inlined_call_operand.vmem [shape: f32[5,1,128], index: 13, kind: input, shape index: {}]
  %s14 = inlined_call_operand.vmem [shape: f32[5,1,128], index: 14, kind: input, shape index: {}]
  %s15 = inlined_call_operand.vmem [shape: f32[5,1,128], index: 15, kind: input, shape index: {}]
  %s16 = inlined_call_operand.vmem [shape: bf16[5,128,128], index: 16, kind: input, shape index: {}]
  %s17 = inlined_call_operand.vmem [shape: f32[5,1,128], index: 17, kind: input, shape index: {}]
  %s18 = inlined_call_operand.vmem [shape: f32[5,1,128], index: 18, kind: input, shape index: {}]
  %s19 = inlined_call_operand.vmem [shape: f32[5,1,128], index: 19, kind: input, shape index: {}]
  %s20 = inlined_call_operand.vmem [shape: bf16[5,128,128], index: 20, kind: input, shape index: {}]
  %s21 = inlined_call_operand.vmem [shape: f32[5,1,128], index: 21, kind: input, shape index: {}]
  %s22 = inlined_call_operand.vmem [shape: f32[5,1,128], index: 22, kind: input, shape index: {}]
  %s23 = inlined_call_operand.vmem [shape: f32[5,1,128], index: 23, kind: input, shape index: {}]
  %s24 = inlined_call_operand.vmem [shape: bf16[128,128], index: 24, kind: input, shape index: {}]
  %s25 = inlined_call_operand.vmem [shape: f32[1,128], index: 25, kind: input, shape index: {}]
  %s26 = inlined_call_operand.vmem [shape: f32[8,128], index: 26, kind: output, shape index: {}]
  %s27 = sld [smem:[#allocation0]]
  $region157: #{gnn_forward.1} parent=0
    _
  %s29 = ssub.s32 1, %s27
  %s30 = scalar_select 0, %s29, %s27
  $region1: #{gnn_forward.1} parent=0
    #allocation4 [shape = 'u8[512]{0}', space=smem, size = 0x200, scoped, tag = 'input window, operand 0, single buffered']
    #allocation5 [shape = 's32[2]{0}', space=sflag, size = 0x8, scoped, tag = 'scoped memory for gnn_forward.1']
    %31 = vsyncpa [#allocation5], 0
    loop: start=0, step=1, limit=7
    $region2: #{gnn_forward.1} parent=1 // loop_pre_header
      _
    $region3: #{gnn_forward.1} parent=1 // loop_header
      %s33 = sphi 0, %s37
      %p34 = scmp.ge.s32.totalorder %s33, 7
      %s41 = sphi 0, %s41
      %s43 = sphi 0, %s41
      %s44 = sphi 0, %s43
      %s58 = sphi 0, %s44
      %s62 = sphi 0, %s62
      %s64 = sphi 0, %s62
      %s65 = sphi 0, %s64
      %s79 = sphi 0, %s65
      %s83 = sphi 0, %s83
      %s85 = sphi 0, %s83
      %s86 = sphi 0, %s85
      %s100 = sphi 0, %s86
      %s104 = sphi 0, %s104
      %s106 = sphi 0, %s104
      %s107 = sphi 0, %s106
      %s121 = sphi 0, %s107
      %s125 = sphi 0, %s125
      %s127 = sphi 0, %s125
      %s128 = sphi 0, %s127
      %s142 = sphi 0, %s128
      %s146 = sphi 0, %s146
      %s148 = sphi 0, %s146
      %s149 = sphi 0, %s148
      %s163 = sphi 0, %s149
      %s167 = sphi 0, %s167
      %s169 = sphi 0, %s167
      %s170 = sphi 0, %s169
      %s184 = sphi 0, %s170
      %s190 = sphi 0, %s192
      %s193 = sphi 0, %s190
      %s194 = sphi 0, %s193
      %s210 = sphi 0, %s194
      %s216 = sphi 0, %s218
      %s219 = sphi 0, %s216
      %s220 = sphi 0, %s219
      %s236 = sphi 0, %s220
      %s242 = sphi 0, %s244
      %s245 = sphi 0, %s242
      %s246 = sphi 0, %s245
      %s262 = sphi 0, %s246
      %s268 = sphi 0, %s270
      %s271 = sphi 0, %s268
      %s272 = sphi 0, %s271
      %s288 = sphi 0, %s272
      %s294 = sphi 0, %s296
      %s297 = sphi 0, %s294
      %s298 = sphi 0, %s297
      %s314 = sphi 0, %s298
      %s320 = sphi 0, %s322
      %s323 = sphi 0, %s320
      %s324 = sphi 0, %s323
      %s340 = sphi 0, %s324
      %s346 = sphi 0, %s348
      %s349 = sphi 0, %s346
      %s350 = sphi 0, %s349
      %s366 = sphi 0, %s350
      %s372 = sphi 0, %s374
      %s375 = sphi 0, %s372
      %s376 = sphi 0, %s375
      %s392 = sphi 0, %s376
      %s398 = sphi 0, %s400
      %s401 = sphi 0, %s398
      %s402 = sphi 0, %s401
      %s418 = sphi 0, %s402
      %s424 = sphi 0, %s426
      %s427 = sphi 0, %s424
      %s428 = sphi 0, %s427
      %s444 = sphi 0, %s428
      %s450 = sphi 0, %s452
      %s453 = sphi 0, %s450
      %s454 = sphi 0, %s453
      %s470 = sphi 0, %s454
      %s476 = sphi 0, %s478
      %s479 = sphi 0, %s476
      %s480 = sphi 0, %s479
      %s496 = sphi 0, %s480
      %s502 = sphi 0, %s504
      %s505 = sphi 0, %s502
      %s506 = sphi 0, %s505
      %s522 = sphi 0, %s506
      %s528 = sphi 0, %s530
      %s531 = sphi 0, %s528
      %s532 = sphi 0, %s531
      %s548 = sphi 0, %s532
      %s554 = sphi 0, %s556
      %s557 = sphi 0, %s554
      %s558 = sphi 0, %s557
      %s574 = sphi 0, %s558
      %s580 = sphi 0, %s582
      %s583 = sphi 0, %s580
      %s584 = sphi 0, %s583
      %s600 = sphi 0, %s584
      %s606 = sphi 0, %s608
      %s609 = sphi 0, %s606
      %s610 = sphi 0, %s609
      %s626 = sphi 0, %s610
      %s630 = sphi 0, %s630
      %s632 = sphi 0, %s630
      %s633 = sphi 0, %s632
      %s647 = sphi 0, %s633
      %s651 = sphi 0, %s651
      %s653 = sphi 0, %s651
      %s654 = sphi 0, %s653
      %s668 = sphi 0, %s654
      %s672 = sphi 0, %s672
      %s674 = sphi 0, %s672
      %s675 = sphi 0, %s674
      %s689 = sphi 0, %s675
    $region4: #{gnn_forward.1} parent=1 // loop_header_branch
      %36 = sbr.rel (%p34) target = $region8
    $region5: #{gnn_forward.1} parent=1 // loop_body
      %s38 = ssub.s32 %s33, 1
      %s39 = ssub.s32 %s33, 2
      %s40 = sadd.s32 %s33, 1
      %s42 = sadd.s32 %s41, 1
      %p45 = scmp.eq.s32.totalorder %s33, 4
      %p46 = scmp.ne.s32.totalorder %s41, %s43
      %p47 = scmp.eq.s32.totalorder %s33, 0
      %p48 = por %p46, %p47
      %p49 = scmp.ne.s32.totalorder %s41, %s43
      %p50 = scmp.eq.s32.totalorder %s38, 4
      %p51 = por %p49, %p50
      %p52 = scmp.ne.s32.totalorder %s43, %s44
      %p53 = scmp.eq.s32.totalorder %s38, 0
      %p54 = por %p52, %p53
      %p55 = scmp.ne.s32.totalorder %s43, %s44
      %p56 = scmp.eq.s32.totalorder %s39, 4
      %p57 = por %p55, %p56
      %p59 = scmp.ne.s32.totalorder %s44, %s58
      %p60 = scmp.eq.s32.totalorder %s39, 0
      %p61 = por %p59, %p60
      %s63 = sadd.s32 %s62, 1
      %p66 = scmp.eq.s32.totalorder %s33, 4
      %p67 = scmp.ne.s32.totalorder %s62, %s64
      %p68 = scmp.eq.s32.totalorder %s33, 0
      %p69 = por %p67, %p68
      %p70 = scmp.ne.s32.totalorder %s62, %s64
      %p71 = scmp.eq.s32.totalorder %s38, 4
      %p72 = por %p70, %p71
      %p73 = scmp.ne.s32.totalorder %s64, %s65
      %p74 = scmp.eq.s32.totalorder %s38, 0
      %p75 = por %p73, %p74
      %p76 = scmp.ne.s32.totalorder %s64, %s65
      %p77 = scmp.eq.s32.totalorder %s39, 4
      %p78 = por %p76, %p77
      %p80 = scmp.ne.s32.totalorder %s65, %s79
      %p81 = scmp.eq.s32.totalorder %s39, 0
      %p82 = por %p80, %p81
      %s84 = sadd.s32 %s83, 1
      %p87 = scmp.eq.s32.totalorder %s33, 4
      %p88 = scmp.ne.s32.totalorder %s83, %s85
      %p89 = scmp.eq.s32.totalorder %s33, 0
      %p90 = por %p88, %p89
      %p91 = scmp.ne.s32.totalorder %s83, %s85
      %p92 = scmp.eq.s32.totalorder %s38, 4
      %p93 = por %p91, %p92
      %p94 = scmp.ne.s32.totalorder %s85, %s86
      %p95 = scmp.eq.s32.totalorder %s38, 0
      %p96 = por %p94, %p95
      %p97 = scmp.ne.s32.totalorder %s85, %s86
      %p98 = scmp.eq.s32.totalorder %s39, 4
      %p99 = por %p97, %p98
      %p101 = scmp.ne.s32.totalorder %s86, %s100
      %p102 = scmp.eq.s32.totalorder %s39, 0
      %p103 = por %p101, %p102
      %s105 = sadd.s32 %s104, 1
      %p108 = scmp.eq.s32.totalorder %s33, 4
      %p109 = scmp.ne.s32.totalorder %s104, %s106
      %p110 = scmp.eq.s32.totalorder %s33, 0
      %p111 = por %p109, %p110
      %p112 = scmp.ne.s32.totalorder %s104, %s106
      %p113 = scmp.eq.s32.totalorder %s38, 4
      %p114 = por %p112, %p113
      %p115 = scmp.ne.s32.totalorder %s106, %s107
      %p116 = scmp.eq.s32.totalorder %s38, 0
      %p117 = por %p115, %p116
      %p118 = scmp.ne.s32.totalorder %s106, %s107
      %p119 = scmp.eq.s32.totalorder %s39, 4
      %p120 = por %p118, %p119
      %p122 = scmp.ne.s32.totalorder %s107, %s121
      %p123 = scmp.eq.s32.totalorder %s39, 0
      %p124 = por %p122, %p123
      %s126 = sadd.s32 %s125, 1
      %p129 = scmp.eq.s32.totalorder %s33, 4
      %p130 = scmp.ne.s32.totalorder %s125, %s127
      %p131 = scmp.eq.s32.totalorder %s33, 0
      %p132 = por %p130, %p131
      %p133 = scmp.ne.s32.totalorder %s125, %s127
      %p134 = scmp.eq.s32.totalorder %s38, 4
      %p135 = por %p133, %p134
      %p136 = scmp.ne.s32.totalorder %s127, %s128
      %p137 = scmp.eq.s32.totalorder %s38, 0
      %p138 = por %p136, %p137
      %p139 = scmp.ne.s32.totalorder %s127, %s128
      %p140 = scmp.eq.s32.totalorder %s39, 4
      %p141 = por %p139, %p140
      %p143 = scmp.ne.s32.totalorder %s128, %s142
      %p144 = scmp.eq.s32.totalorder %s39, 0
      %p145 = por %p143, %p144
      %s147 = sadd.s32 %s146, 1
      %p150 = scmp.eq.s32.totalorder %s33, 4
      %p151 = scmp.ne.s32.totalorder %s146, %s148
      %p152 = scmp.eq.s32.totalorder %s33, 0
      %p153 = por %p151, %p152
      %p154 = scmp.ne.s32.totalorder %s146, %s148
      %p155 = scmp.eq.s32.totalorder %s38, 4
      %p156 = por %p154, %p155
      %p157 = scmp.ne.s32.totalorder %s148, %s149
      %p158 = scmp.eq.s32.totalorder %s38, 0
      %p159 = por %p157, %p158
      %p160 = scmp.ne.s32.totalorder %s148, %s149
      %p161 = scmp.eq.s32.totalorder %s39, 4
      %p162 = por %p160, %p161
      %p164 = scmp.ne.s32.totalorder %s149, %s163
      %p165 = scmp.eq.s32.totalorder %s39, 0
      %p166 = por %p164, %p165
      %s168 = sadd.s32 %s167, 1
      %p171 = scmp.eq.s32.totalorder %s33, 4
      %p172 = scmp.ne.s32.totalorder %s167, %s169
      %p173 = scmp.eq.s32.totalorder %s33, 0
      %p174 = por %p172, %p173
      %p175 = scmp.ne.s32.totalorder %s167, %s169
      %p176 = scmp.eq.s32.totalorder %s38, 4
      %p177 = por %p175, %p176
      %p178 = scmp.ne.s32.totalorder %s169, %s170
      %p179 = scmp.eq.s32.totalorder %s38, 0
      %p180 = por %p178, %p179
      %p181 = scmp.ne.s32.totalorder %s169, %s170
      %p182 = scmp.eq.s32.totalorder %s39, 4
      %p183 = por %p181, %p182
      %p185 = scmp.ne.s32.totalorder %s170, %s184
      %p186 = scmp.eq.s32.totalorder %s39, 0
      %p187 = por %p185, %p186
      %s188 = ssub.s32 %s33, %s40
      %p189 = scmp.eq.s32.totalorder %s188, 0
      %s191 = sadd.s32 %s190, 1
      %s192 = scalar_select %p189, %s190, %s191
      %p195 = pneg %p189
      %p196 = scmp.eq.s32.totalorder %s33, 4
      %p197 = por %p195, %p196
      %p198 = scmp.ne.s32.totalorder %s190, %s193
      %p199 = scmp.eq.s32.totalorder %s33, 0
      %p200 = por %p198, %p199
      %p201 = scmp.ne.s32.totalorder %s190, %s193
      %p202 = scmp.eq.s32.totalorder %s38, 4
      %p203 = por %p201, %p202
      %p204 = scmp.ne.s32.totalorder %s193, %s194
      %p205 = scmp.eq.s32.totalorder %s38, 0
      %p206 = por %p204, %p205
      %p207 = scmp.ne.s32.totalorder %s193, %s194
      %p208 = scmp.eq.s32.totalorder %s39, 4
      %p209 = por %p207, %p208
      %p211 = scmp.ne.s32.totalorder %s194, %s210
      %p212 = scmp.eq.s32.totalorder %s39, 0
      %p213 = por %p211, %p212
      %s214 = ssub.s32 %s33, %s40
      %p215 = scmp.eq.s32.totalorder %s214, 0
      %s217 = sadd.s32 %s216, 1
      %s218 = scalar_select %p215, %s216, %s217
      %p221 = pneg %p215
      %p222 = scmp.eq.s32.totalorder %s33, 4
      %p223 = por %p221, %p222
      %p224 = scmp.ne.s32.totalorder %s216, %s219
      %p225 = scmp.eq.s32.totalorder %s33, 0
      %p226 = por %p224, %p225
      %p227 = scmp.ne.s32.totalorder %s216, %s219
      %p228 = scmp.eq.s32.totalorder %s38, 4
      %p229 = por %p227, %p228
      %p230 = scmp.ne.s32.totalorder %s219, %s220
      %p231 = scmp.eq.s32.totalorder %s38, 0
      %p232 = por %p230, %p231
      %p233 = scmp.ne.s32.totalorder %s219, %s220
      %p234 = scmp.eq.s32.totalorder %s39, 4
      %p235 = por %p233, %p234
      %p237 = scmp.ne.s32.totalorder %s220, %s236
      %p238 = scmp.eq.s32.totalorder %s39, 0
      %p239 = por %p237, %p238
      %s240 = ssub.s32 %s33, %s40
      %p241 = scmp.eq.s32.totalorder %s240, 0
      %s243 = sadd.s32 %s242, 1
      %s244 = scalar_select %p241, %s242, %s243
      %p247 = pneg %p241
      %p248 = scmp.eq.s32.totalorder %s33, 4
      %p249 = por %p247, %p248
      %p250 = scmp.ne.s32.totalorder %s242, %s245
      %p251 = scmp.eq.s32.totalorder %s33, 0
      %p252 = por %p250, %p251
      %p253 = scmp.ne.s32.totalorder %s242, %s245
      %p254 = scmp.eq.s32.totalorder %s38, 4
      %p255 = por %p253, %p254
      %p256 = scmp.ne.s32.totalorder %s245, %s246
      %p257 = scmp.eq.s32.totalorder %s38, 0
      %p258 = por %p256, %p257
      %p259 = scmp.ne.s32.totalorder %s245, %s246
      %p260 = scmp.eq.s32.totalorder %s39, 4
      %p261 = por %p259, %p260
      %p263 = scmp.ne.s32.totalorder %s246, %s262
      %p264 = scmp.eq.s32.totalorder %s39, 0
      %p265 = por %p263, %p264
      %s266 = ssub.s32 %s33, %s40
      %p267 = scmp.eq.s32.totalorder %s266, 0
      %s269 = sadd.s32 %s268, 1
      %s270 = scalar_select %p267, %s268, %s269
      %p273 = pneg %p267
      %p274 = scmp.eq.s32.totalorder %s33, 4
      %p275 = por %p273, %p274
      %p276 = scmp.ne.s32.totalorder %s268, %s271
      %p277 = scmp.eq.s32.totalorder %s33, 0
      %p278 = por %p276, %p277
      %p279 = scmp.ne.s32.totalorder %s268, %s271
      %p280 = scmp.eq.s32.totalorder %s38, 4
      %p281 = por %p279, %p280
      %p282 = scmp.ne.s32.totalorder %s271, %s272
      %p283 = scmp.eq.s32.totalorder %s38, 0
      %p284 = por %p282, %p283
      %p285 = scmp.ne.s32.totalorder %s271, %s272
      %p286 = scmp.eq.s32.totalorder %s39, 4
      %p287 = por %p285, %p286
      %p289 = scmp.ne.s32.totalorder %s272, %s288
      %p290 = scmp.eq.s32.totalorder %s39, 0
      %p291 = por %p289, %p290
      %s292 = ssub.s32 %s33, %s40
      %p293 = scmp.eq.s32.totalorder %s292, 0
      %s295 = sadd.s32 %s294, 1
      %s296 = scalar_select %p293, %s294, %s295
      %p299 = pneg %p293
      %p300 = scmp.eq.s32.totalorder %s33, 4
      %p301 = por %p299, %p300
      %p302 = scmp.ne.s32.totalorder %s294, %s297
      %p303 = scmp.eq.s32.totalorder %s33, 0
      %p304 = por %p302, %p303
      %p305 = scmp.ne.s32.totalorder %s294, %s297
      %p306 = scmp.eq.s32.totalorder %s38, 4
      %p307 = por %p305, %p306
      %p308 = scmp.ne.s32.totalorder %s297, %s298
      %p309 = scmp.eq.s32.totalorder %s38, 0
      %p310 = por %p308, %p309
      %p311 = scmp.ne.s32.totalorder %s297, %s298
      %p312 = scmp.eq.s32.totalorder %s39, 4
      %p313 = por %p311, %p312
      %p315 = scmp.ne.s32.totalorder %s298, %s314
      %p316 = scmp.eq.s32.totalorder %s39, 0
      %p317 = por %p315, %p316
      %s318 = ssub.s32 %s33, %s40
      %p319 = scmp.eq.s32.totalorder %s318, 0
      %s321 = sadd.s32 %s320, 1
      %s322 = scalar_select %p319, %s320, %s321
      %p325 = pneg %p319
      %p326 = scmp.eq.s32.totalorder %s33, 4
      %p327 = por %p325, %p326
      %p328 = scmp.ne.s32.totalorder %s320, %s323
      %p329 = scmp.eq.s32.totalorder %s33, 0
      %p330 = por %p328, %p329
      %p331 = scmp.ne.s32.totalorder %s320, %s323
      %p332 = scmp.eq.s32.totalorder %s38, 4
      %p333 = por %p331, %p332
      %p334 = scmp.ne.s32.totalorder %s323, %s324
      %p335 = scmp.eq.s32.totalorder %s38, 0
      %p336 = por %p334, %p335
      %p337 = scmp.ne.s32.totalorder %s323, %s324
      %p338 = scmp.eq.s32.totalorder %s39, 4
      %p339 = por %p337, %p338
      %p341 = scmp.ne.s32.totalorder %s324, %s340
      %p342 = scmp.eq.s32.totalorder %s39, 0
      %p343 = por %p341, %p342
      %s344 = ssub.s32 %s33, %s40
      %p345 = scmp.eq.s32.totalorder %s344, 0
      %s347 = sadd.s32 %s346, 1
      %s348 = scalar_select %p345, %s346, %s347
      %p351 = pneg %p345
      %p352 = scmp.eq.s32.totalorder %s33, 4
      %p353 = por %p351, %p352
      %p354 = scmp.ne.s32.totalorder %s346, %s349
      %p355 = scmp.eq.s32.totalorder %s33, 0
      %p356 = por %p354, %p355
      %p357 = scmp.ne.s32.totalorder %s346, %s349
      %p358 = scmp.eq.s32.totalorder %s38, 4
      %p359 = por %p357, %p358
      %p360 = scmp.ne.s32.totalorder %s349, %s350
      %p361 = scmp.eq.s32.totalorder %s38, 0
      %p362 = por %p360, %p361
      %p363 = scmp.ne.s32.totalorder %s349, %s350
      %p364 = scmp.eq.s32.totalorder %s39, 4
      %p365 = por %p363, %p364
      %p367 = scmp.ne.s32.totalorder %s350, %s366
      %p368 = scmp.eq.s32.totalorder %s39, 0
      %p369 = por %p367, %p368
      %s370 = ssub.s32 %s33, %s40
      %p371 = scmp.eq.s32.totalorder %s370, 0
      %s373 = sadd.s32 %s372, 1
      %s374 = scalar_select %p371, %s372, %s373
      %p377 = pneg %p371
      %p378 = scmp.eq.s32.totalorder %s33, 4
      %p379 = por %p377, %p378
      %p380 = scmp.ne.s32.totalorder %s372, %s375
      %p381 = scmp.eq.s32.totalorder %s33, 0
      %p382 = por %p380, %p381
      %p383 = scmp.ne.s32.totalorder %s372, %s375
      %p384 = scmp.eq.s32.totalorder %s38, 4
      %p385 = por %p383, %p384
      %p386 = scmp.ne.s32.totalorder %s375, %s376
      %p387 = scmp.eq.s32.totalorder %s38, 0
      %p388 = por %p386, %p387
      %p389 = scmp.ne.s32.totalorder %s375, %s376
      %p390 = scmp.eq.s32.totalorder %s39, 4
      %p391 = por %p389, %p390
      %p393 = scmp.ne.s32.totalorder %s376, %s392
      %p394 = scmp.eq.s32.totalorder %s39, 0
      %p395 = por %p393, %p394
      %s396 = ssub.s32 %s33, %s40
      %p397 = scmp.eq.s32.totalorder %s396, 0
      %s399 = sadd.s32 %s398, 1
      %s400 = scalar_select %p397, %s398, %s399
      %p403 = pneg %p397
      %p404 = scmp.eq.s32.totalorder %s33, 4
      %p405 = por %p403, %p404
      %p406 = scmp.ne.s32.totalorder %s398, %s401
      %p407 = scmp.eq.s32.totalorder %s33, 0
      %p408 = por %p406, %p407
      %p409 = scmp.ne.s32.totalorder %s398, %s401
      %p410 = scmp.eq.s32.totalorder %s38, 4
      %p411 = por %p409, %p410
      %p412 = scmp.ne.s32.totalorder %s401, %s402
      %p413 = scmp.eq.s32.totalorder %s38, 0
      %p414 = por %p412, %p413
      %p415 = scmp.ne.s32.totalorder %s401, %s402
      %p416 = scmp.eq.s32.totalorder %s39, 4
      %p417 = por %p415, %p416
      %p419 = scmp.ne.s32.totalorder %s402, %s418
      %p420 = scmp.eq.s32.totalorder %s39, 0
      %p421 = por %p419, %p420
      %s422 = ssub.s32 %s33, %s40
      %p423 = scmp.eq.s32.totalorder %s422, 0
      %s425 = sadd.s32 %s424, 1
      %s426 = scalar_select %p423, %s424, %s425
      %p429 = pneg %p423
      %p430 = scmp.eq.s32.totalorder %s33, 4
      %p431 = por %p429, %p430
      %p432 = scmp.ne.s32.totalorder %s424, %s427
      %p433 = scmp.eq.s32.totalorder %s33, 0
      %p434 = por %p432, %p433
      %p435 = scmp.ne.s32.totalorder %s424, %s427
      %p436 = scmp.eq.s32.totalorder %s38, 4
      %p437 = por %p435, %p436
      %p438 = scmp.ne.s32.totalorder %s427, %s428
      %p439 = scmp.eq.s32.totalorder %s38, 0
      %p440 = por %p438, %p439
      %p441 = scmp.ne.s32.totalorder %s427, %s428
      %p442 = scmp.eq.s32.totalorder %s39, 4
      %p443 = por %p441, %p442
      %p445 = scmp.ne.s32.totalorder %s428, %s444
      %p446 = scmp.eq.s32.totalorder %s39, 0
      %p447 = por %p445, %p446
      %s448 = ssub.s32 %s33, %s40
      %p449 = scmp.eq.s32.totalorder %s448, 0
      %s451 = sadd.s32 %s450, 1
      %s452 = scalar_select %p449, %s450, %s451
      %p455 = pneg %p449
      %p456 = scmp.eq.s32.totalorder %s33, 4
      %p457 = por %p455, %p456
      %p458 = scmp.ne.s32.totalorder %s450, %s453
      %p459 = scmp.eq.s32.totalorder %s33, 0
      %p460 = por %p458, %p459
      %p461 = scmp.ne.s32.totalorder %s450, %s453
      %p462 = scmp.eq.s32.totalorder %s38, 4
      %p463 = por %p461, %p462
      %p464 = scmp.ne.s32.totalorder %s453, %s454
      %p465 = scmp.eq.s32.totalorder %s38, 0
      %p466 = por %p464, %p465
      %p467 = scmp.ne.s32.totalorder %s453, %s454
      %p468 = scmp.eq.s32.totalorder %s39, 4
      %p469 = por %p467, %p468
      %p471 = scmp.ne.s32.totalorder %s454, %s470
      %p472 = scmp.eq.s32.totalorder %s39, 0
      %p473 = por %p471, %p472
      %s474 = ssub.s32 %s33, %s40
      %p475 = scmp.eq.s32.totalorder %s474, 0
      %s477 = sadd.s32 %s476, 1
      %s478 = scalar_select %p475, %s476, %s477
      %p481 = pneg %p475
      %p482 = scmp.eq.s32.totalorder %s33, 4
      %p483 = por %p481, %p482
      %p484 = scmp.ne.s32.totalorder %s476, %s479
      %p485 = scmp.eq.s32.totalorder %s33, 0
      %p486 = por %p484, %p485
      %p487 = scmp.ne.s32.totalorder %s476, %s479
      %p488 = scmp.eq.s32.totalorder %s38, 4
      %p489 = por %p487, %p488
      %p490 = scmp.ne.s32.totalorder %s479, %s480
      %p491 = scmp.eq.s32.totalorder %s38, 0
      %p492 = por %p490, %p491
      %p493 = scmp.ne.s32.totalorder %s479, %s480
      %p494 = scmp.eq.s32.totalorder %s39, 4
      %p495 = por %p493, %p494
      %p497 = scmp.ne.s32.totalorder %s480, %s496
      %p498 = scmp.eq.s32.totalorder %s39, 0
      %p499 = por %p497, %p498
      %s500 = ssub.s32 %s33, %s40
      %p501 = scmp.eq.s32.totalorder %s500, 0
      %s503 = sadd.s32 %s502, 1
      %s504 = scalar_select %p501, %s502, %s503
      %p507 = pneg %p501
      %p508 = scmp.eq.s32.totalorder %s33, 4
      %p509 = por %p507, %p508
      %p510 = scmp.ne.s32.totalorder %s502, %s505
      %p511 = scmp.eq.s32.totalorder %s33, 0
      %p512 = por %p510, %p511
      %p513 = scmp.ne.s32.totalorder %s502, %s505
      %p514 = scmp.eq.s32.totalorder %s38, 4
      %p515 = por %p513, %p514
      %p516 = scmp.ne.s32.totalorder %s505, %s506
      %p517 = scmp.eq.s32.totalorder %s38, 0
      %p518 = por %p516, %p517
      %p519 = scmp.ne.s32.totalorder %s505, %s506
      %p520 = scmp.eq.s32.totalorder %s39, 4
      %p521 = por %p519, %p520
      %p523 = scmp.ne.s32.totalorder %s506, %s522
      %p524 = scmp.eq.s32.totalorder %s39, 0
      %p525 = por %p523, %p524
      %s526 = ssub.s32 %s33, %s40
      %p527 = scmp.eq.s32.totalorder %s526, 0
      %s529 = sadd.s32 %s528, 1
      %s530 = scalar_select %p527, %s528, %s529
      %p533 = pneg %p527
      %p534 = scmp.eq.s32.totalorder %s33, 4
      %p535 = por %p533, %p534
      %p536 = scmp.ne.s32.totalorder %s528, %s531
      %p537 = scmp.eq.s32.totalorder %s33, 0
      %p538 = por %p536, %p537
      %p539 = scmp.ne.s32.totalorder %s528, %s531
      %p540 = scmp.eq.s32.totalorder %s38, 4
      %p541 = por %p539, %p540
      %p542 = scmp.ne.s32.totalorder %s531, %s532
      %p543 = scmp.eq.s32.totalorder %s38, 0
      %p544 = por %p542, %p543
      %p545 = scmp.ne.s32.totalorder %s531, %s532
      %p546 = scmp.eq.s32.totalorder %s39, 4
      %p547 = por %p545, %p546
      %p549 = scmp.ne.s32.totalorder %s532, %s548
      %p550 = scmp.eq.s32.totalorder %s39, 0
      %p551 = por %p549, %p550
      %s552 = ssub.s32 %s33, %s40
      %p553 = scmp.eq.s32.totalorder %s552, 0
      %s555 = sadd.s32 %s554, 1
      %s556 = scalar_select %p553, %s554, %s555
      %p559 = pneg %p553
      %p560 = scmp.eq.s32.totalorder %s33, 4
      %p561 = por %p559, %p560
      %p562 = scmp.ne.s32.totalorder %s554, %s557
      %p563 = scmp.eq.s32.totalorder %s33, 0
      %p564 = por %p562, %p563
      %p565 = scmp.ne.s32.totalorder %s554, %s557
      %p566 = scmp.eq.s32.totalorder %s38, 4
      %p567 = por %p565, %p566
      %p568 = scmp.ne.s32.totalorder %s557, %s558
      %p569 = scmp.eq.s32.totalorder %s38, 0
      %p570 = por %p568, %p569
      %p571 = scmp.ne.s32.totalorder %s557, %s558
      %p572 = scmp.eq.s32.totalorder %s39, 4
      %p573 = por %p571, %p572
      %p575 = scmp.ne.s32.totalorder %s558, %s574
      %p576 = scmp.eq.s32.totalorder %s39, 0
      %p577 = por %p575, %p576
      %s578 = ssub.s32 %s33, %s40
      %p579 = scmp.eq.s32.totalorder %s578, 0
      %s581 = sadd.s32 %s580, 1
      %s582 = scalar_select %p579, %s580, %s581
      %p585 = pneg %p579
      %p586 = scmp.eq.s32.totalorder %s33, 4
      %p587 = por %p585, %p586
      %p588 = scmp.ne.s32.totalorder %s580, %s583
      %p589 = scmp.eq.s32.totalorder %s33, 0
      %p590 = por %p588, %p589
      %p591 = scmp.ne.s32.totalorder %s580, %s583
      %p592 = scmp.eq.s32.totalorder %s38, 4
      %p593 = por %p591, %p592
      %p594 = scmp.ne.s32.totalorder %s583, %s584
      %p595 = scmp.eq.s32.totalorder %s38, 0
      %p596 = por %p594, %p595
      %p597 = scmp.ne.s32.totalorder %s583, %s584
      %p598 = scmp.eq.s32.totalorder %s39, 4
      %p599 = por %p597, %p598
      %p601 = scmp.ne.s32.totalorder %s584, %s600
      %p602 = scmp.eq.s32.totalorder %s39, 0
      %p603 = por %p601, %p602
      %s604 = ssub.s32 %s33, %s40
      %p605 = scmp.eq.s32.totalorder %s604, 0
      %s607 = sadd.s32 %s606, 1
      %s608 = scalar_select %p605, %s606, %s607
      %p611 = pneg %p605
      %p612 = scmp.eq.s32.totalorder %s33, 4
      %p613 = por %p611, %p612
      %p614 = scmp.ne.s32.totalorder %s606, %s609
      %p615 = scmp.eq.s32.totalorder %s33, 0
      %p616 = por %p614, %p615
      %p617 = scmp.ne.s32.totalorder %s606, %s609
      %p618 = scmp.eq.s32.totalorder %s38, 4
      %p619 = por %p617, %p618
      %p620 = scmp.ne.s32.totalorder %s609, %s610
      %p621 = scmp.eq.s32.totalorder %s38, 0
      %p622 = por %p620, %p621
      %p623 = scmp.ne.s32.totalorder %s609, %s610
      %p624 = scmp.eq.s32.totalorder %s39, 4
      %p625 = por %p623, %p624
      %p627 = scmp.ne.s32.totalorder %s610, %s626
      %p628 = scmp.eq.s32.totalorder %s39, 0
      %p629 = por %p627, %p628
      %s631 = sadd.s32 %s630, 1
      %p634 = scmp.eq.s32.totalorder %s33, 4
      %p635 = scmp.ne.s32.totalorder %s630, %s632
      %p636 = scmp.eq.s32.totalorder %s33, 0
      %p637 = por %p635, %p636
      %p638 = scmp.ne.s32.totalorder %s630, %s632
      %p639 = scmp.eq.s32.totalorder %s38, 4
      %p640 = por %p638, %p639
      %p641 = scmp.ne.s32.totalorder %s632, %s633
      %p642 = scmp.eq.s32.totalorder %s38, 0
      %p643 = por %p641, %p642
      %p644 = scmp.ne.s32.totalorder %s632, %s633
      %p645 = scmp.eq.s32.totalorder %s39, 4
      %p646 = por %p644, %p645
      %p648 = scmp.ne.s32.totalorder %s633, %s647
      %p649 = scmp.eq.s32.totalorder %s39, 0
      %p650 = por %p648, %p649
      %s652 = sadd.s32 %s651, 1
      %p655 = scmp.eq.s32.totalorder %s33, 4
      %p656 = scmp.ne.s32.totalorder %s651, %s653
      %p657 = scmp.eq.s32.totalorder %s33, 0
      %p658 = por %p656, %p657
      %p659 = scmp.ne.s32.totalorder %s651, %s653
      %p660 = scmp.eq.s32.totalorder %s38, 4
      %p661 = por %p659, %p660
      %p662 = scmp.ne.s32.totalorder %s653, %s654
      %p663 = scmp.eq.s32.totalorder %s38, 0
      %p664 = por %p662, %p663
      %p665 = scmp.ne.s32.totalorder %s653, %s654
      %p666 = scmp.eq.s32.totalorder %s39, 4
      %p667 = por %p665, %p666
      %p669 = scmp.ne.s32.totalorder %s654, %s668
      %p670 = scmp.eq.s32.totalorder %s39, 0
      %p671 = por %p669, %p670
      %s673 = sadd.s32 %s672, 1
      %p676 = scmp.eq.s32.totalorder %s33, 4
      %p677 = scmp.ne.s32.totalorder %s672, %s674
      %p678 = scmp.eq.s32.totalorder %s33, 0
      %p679 = por %p677, %p678
      %p680 = scmp.ne.s32.totalorder %s672, %s674
      %p681 = scmp.eq.s32.totalorder %s38, 4
      %p682 = por %p680, %p681
      %p683 = scmp.ne.s32.totalorder %s674, %s675
      %p684 = scmp.eq.s32.totalorder %s38, 0
      %p685 = por %p683, %p684
      %p686 = scmp.ne.s32.totalorder %s674, %s675
      %p687 = scmp.eq.s32.totalorder %s39, 4
      %p688 = por %p686, %p687
      %p690 = scmp.ne.s32.totalorder %s675, %s689
      %p691 = scmp.eq.s32.totalorder %s39, 0
      %p692 = por %p690, %p691
      %p693 = scmp.le.s32.totalorder 1, %s33
      %p694 = scmp.lt.s32.totalorder %s33, 6
      %p695 = pnand %p693, %p694
      %p696 = pneg %p695
      // Predicated region
      $region9: #{gnn_forward.1} parent=5 // pred_check
        _
      $region10: #{gnn_forward.1} parent=5 // pred_check_branch
        %698 = sbr.rel (%p695) target = $region12
      $region11: #{gnn_forward.1} parent=5 // pred_region
        %s699 = ssub.s32 %s33, 1
        // Predicated region
        $region13: #{gnn_forward.1} parent=11 // pred_check
          %p700 = pneg %p54
        $region14: #{gnn_forward.1} parent=11 // pred_check_branch
          %702 = sbr.rel (%p700) target = $region16
        $region15: #{gnn_forward.1} parent=11 // pred_region
          %s704 = ssub.s32 16, 16
          %705 = vsyncadd [#allocation5], %s704
          %s707 = sshll.u32 %s0, 4
          %s708 = int_to_ptr.vmem [resolvable:$true] %s707
          %710 = dma.vmem_to_smem %s708, 16, [#allocation4], [#allocation5]
        $region16: #{gnn_forward.1} parent=11 // pred_fallthru
          _
        // Predicated region
        $region17: #{gnn_forward.1} parent=11 // pred_check
          %p711 = pneg %p75
        $region18: #{gnn_forward.1} parent=11 // pred_check_branch
          %713 = sbr.rel (%p711) target = $region20
        $region19: #{gnn_forward.1} parent=11 // pred_region
          _
        $region20: #{gnn_forward.1} parent=11 // pred_fallthru
          _
        // Predicated region
        $region21: #{gnn_forward.1} parent=11 // pred_check
          %p714 = pneg %p96
        $region22: #{gnn_forward.1} parent=11 // pred_check_branch
          %716 = sbr.rel (%p714) target = $region24
        $region23: #{gnn_forward.1} parent=11 // pred_region
          _
        $region24: #{gnn_forward.1} parent=11 // pred_fallthru
          _
        // Predicated region
        $region25: #{gnn_forward.1} parent=11 // pred_check
          %p717 = pneg %p117
        $region26: #{gnn_forward.1} parent=11 // pred_check_branch
          %719 = sbr.rel (%p717) target = $region28
        $region27: #{gnn_forward.1} parent=11 // pred_region
          _
        $region28: #{gnn_forward.1} parent=11 // pred_fallthru
          _
        // Predicated region
        $region29: #{gnn_forward.1} parent=11 // pred_check
          %p720 = pneg %p138
        $region30: #{gnn_forward.1} parent=11 // pred_check_branch
          %722 = sbr.rel (%p720) target = $region32
        $region31: #{gnn_forward.1} parent=11 // pred_region
          _
        $region32: #{gnn_forward.1} parent=11 // pred_fallthru
          _
        // Predicated region
        $region33: #{gnn_forward.1} parent=11 // pred_check
          %p723 = pneg %p159
        $region34: #{gnn_forward.1} parent=11 // pred_check_branch
          %725 = sbr.rel (%p723) target = $region36
        $region35: #{gnn_forward.1} parent=11 // pred_region
          _
        $region36: #{gnn_forward.1} parent=11 // pred_fallthru
          _
        // Predicated region
        $region37: #{gnn_forward.1} parent=11 // pred_check
          %p726 = pneg %p180
        $region38: #{gnn_forward.1} parent=11 // pred_check_branch
          %728 = sbr.rel (%p726) target = $region40
        $region39: #{gnn_forward.1} parent=11 // pred_region
          _
        $region40: #{gnn_forward.1} parent=11 // pred_fallthru
          _
        // Predicated region
        $region41: #{gnn_forward.1} parent=11 // pred_check
          %p729 = pneg %p643
        $region42: #{gnn_forward.1} parent=11 // pred_check_branch
          %731 = sbr.rel (%p729) target = $region44
        $region43: #{gnn_forward.1} parent=11 // pred_region
          _
        $region44: #{gnn_forward.1} parent=11 // pred_fallthru
          _
        // Predicated region
        $region45: #{gnn_forward.1} parent=11 // pred_check
          %p732 = pneg %p664
        $region46: #{gnn_forward.1} parent=11 // pred_check_branch
          %734 = sbr.rel (%p732) target = $region48
        $region47: #{gnn_forward.1} parent=11 // pred_region
          _
        $region48: #{gnn_forward.1} parent=11 // pred_fallthru
          _
      $region12: #{gnn_forward.1} parent=5 // pred_fallthru
        _
      %p735 = scmp.lt.s32.totalorder %s33, 5
      // Predicated region
      $region49: #{gnn_forward.1} parent=5 // pred_check
        %p736 = pneg %p735
      $region50: #{gnn_forward.1} parent=5 // pred_check_branch
        %738 = sbr.rel (%p736) target = $region52
      $region51: #{gnn_forward.1} parent=5 // pred_region
        // Predicated region
        $region53: #{gnn_forward.1} parent=51 // pred_check
          %p739 = pneg %p200
        $region54: #{gnn_forward.1} parent=51 // pred_check_branch
          %741 = sbr.rel (%p739) target = $region56
        $region55: #{gnn_forward.1} parent=51 // pred_region
          %p742 = scmp.lt.s32.totalorder %s33, 4
          %s743 = scalar_select %p742, %s33, 4
          %s744 = smul.addr %s743, 4
          %s745 = smul.addr %s744, 8
          %s746 = scalar_lea.vmem %s7, %s745
        $region56: #{gnn_forward.1} parent=51 // pred_fallthru
          _
        // Predicated region
        $region57: #{gnn_forward.1} parent=51 // pred_check
          %p747 = pneg %p226
        $region58: #{gnn_forward.1} parent=51 // pred_check_branch
          %749 = sbr.rel (%p747) target = $region60
        $region59: #{gnn_forward.1} parent=51 // pred_region
          %p750 = scmp.lt.s32.totalorder %s33, 4
          %s751 = scalar_select %p750, %s33, 4
          %s752 = smul.addr %s751, 16
          %s753 = smul.addr %s752, 4
          %s754 = scalar_lea.vmem %s8, %s753
        $region60: #{gnn_forward.1} parent=51 // pred_fallthru
          _
        // Predicated region
        $region61: #{gnn_forward.1} parent=51 // pred_check
          %p755 = pneg %p252
        $region62: #{gnn_forward.1} parent=51 // pred_check_branch
          %757 = sbr.rel (%p755) target = $region64
        $region63: #{gnn_forward.1} parent=51 // pred_region
          %p758 = scmp.lt.s32.totalorder %s33, 4
          %s759 = scalar_select %p758, %s33, 4
          %s760 = scalar_lea.vmem %s9, %s759
        $region64: #{gnn_forward.1} parent=51 // pred_fallthru
          _
        // Predicated region
        $region65: #{gnn_forward.1} parent=51 // pred_check
          %p761 = pneg %p278
        $region66: #{gnn_forward.1} parent=51 // pred_check_branch
          %763 = sbr.rel (%p761) target = $region68
        $region67: #{gnn_forward.1} parent=51 // pred_region
          %p764 = scmp.lt.s32.totalorder %s33, 4
          %s765 = scalar_select %p764, %s33, 4
          %s766 = scalar_lea.vmem %s10, %s765
        $region68: #{gnn_forward.1} parent=51 // pred_fallthru
          _
        // Predicated region
        $region69: #{gnn_forward.1} parent=51 // pred_check
          %p767 = pneg %p304
        $region70: #{gnn_forward.1} parent=51 // pred_check_branch
          %769 = sbr.rel (%p767) target = $region72
        $region71: #{gnn_forward.1} parent=51 // pred_region
          %p770 = scmp.lt.s32.totalorder %s33, 4
          %s771 = scalar_select %p770, %s33, 4
          %s772 = scalar_lea.vmem %s11, %s771
        $region72: #{gnn_forward.1} parent=51 // pred_fallthru
          _
        // Predicated region
        $region73: #{gnn_forward.1} parent=51 // pred_check
          %p773 = pneg %p330
        $region74: #{gnn_forward.1} parent=51 // pred_check_branch
          %775 = sbr.rel (%p773) target = $region76
        $region75: #{gnn_forward.1} parent=51 // pred_region
          %p776 = scmp.lt.s32.totalorder %s33, 4
          %s777 = scalar_select %p776, %s33, 4
          %s778 = smul.addr %s777, 16
          %s779 = smul.addr %s778, 4
          %s780 = scalar_lea.vmem %s12, %s779
        $region76: #{gnn_forward.1} parent=51 // pred_fallthru
          _
        // Predicated region
        $region77: #{gnn_forward.1} parent=51 // pred_check
          %p781 = pneg %p356
        $region78: #{gnn_forward.1} parent=51 // pred_check_branch
          %783 = sbr.rel (%p781) target = $region80
        $region79: #{gnn_forward.1} parent=51 // pred_region
          %p784 = scmp.lt.s32.totalorder %s33, 4
          %s785 = scalar_select %p784, %s33, 4
          %s786 = scalar_lea.vmem %s13, %s785
        $region80: #{gnn_forward.1} parent=51 // pred_fallthru
          _
        // Predicated region
        $region81: #{gnn_forward.1} parent=51 // pred_check
          %p787 = pneg %p382
        $region82: #{gnn_forward.1} parent=51 // pred_check_branch
          %789 = sbr.rel (%p787) target = $region84
        $region83: #{gnn_forward.1} parent=51 // pred_region
          %p790 = scmp.lt.s32.totalorder %s33, 4
          %s791 = scalar_select %p790, %s33, 4
          %s792 = scalar_lea.vmem %s14, %s791
        $region84: #{gnn_forward.1} parent=51 // pred_fallthru
          _
        // Predicated region
        $region85: #{gnn_forward.1} parent=51 // pred_check
          %p793 = pneg %p408
        $region86: #{gnn_forward.1} parent=51 // pred_check_branch
          %795 = sbr.rel (%p793) target = $region88
        $region87: #{gnn_forward.1} parent=51 // pred_region
          %p796 = scmp.lt.s32.totalorder %s33, 4
          %s797 = scalar_select %p796, %s33, 4
          %s798 = scalar_lea.vmem %s15, %s797
        $region88: #{gnn_forward.1} parent=51 // pred_fallthru
          _
        // Predicated region
        $region89: #{gnn_forward.1} parent=51 // pred_check
          %p799 = pneg %p434
        $region90: #{gnn_forward.1} parent=51 // pred_check_branch
          %801 = sbr.rel (%p799) target = $region92
        $region91: #{gnn_forward.1} parent=51 // pred_region
          %p802 = scmp.lt.s32.totalorder %s33, 4
          %s803 = scalar_select %p802, %s33, 4
          %s804 = smul.addr %s803, 16
          %s805 = smul.addr %s804, 4
          %s806 = scalar_lea.vmem %s16, %s805
        $region92: #{gnn_forward.1} parent=51 // pred_fallthru
          _
        // Predicated region
        $region93: #{gnn_forward.1} parent=51 // pred_check
          %p807 = pneg %p460
        $region94: #{gnn_forward.1} parent=51 // pred_check_branch
          %809 = sbr.rel (%p807) target = $region96
        $region95: #{gnn_forward.1} parent=51 // pred_region
          %p810 = scmp.lt.s32.totalorder %s33, 4
          %s811 = scalar_select %p810, %s33, 4
          %s812 = scalar_lea.vmem %s17, %s811
        $region96: #{gnn_forward.1} parent=51 // pred_fallthru
          _
        // Predicated region
        $region97: #{gnn_forward.1} parent=51 // pred_check
          %p813 = pneg %p486
        $region98: #{gnn_forward.1} parent=51 // pred_check_branch
          %815 = sbr.rel (%p813) target = $region100
        $region99: #{gnn_forward.1} parent=51 // pred_region
          %p816 = scmp.lt.s32.totalorder %s33, 4
          %s817 = scalar_select %p816, %s33, 4
          %s818 = scalar_lea.vmem %s18, %s817
        $region100: #{gnn_forward.1} parent=51 // pred_fallthru
          _
        // Predicated region
        $region101: #{gnn_forward.1} parent=51 // pred_check
          %p819 = pneg %p512
        $region102: #{gnn_forward.1} parent=51 // pred_check_branch
          %821 = sbr.rel (%p819) target = $region104
        $region103: #{gnn_forward.1} parent=51 // pred_region
          %p822 = scmp.lt.s32.totalorder %s33, 4
          %s823 = scalar_select %p822, %s33, 4
          %s824 = scalar_lea.vmem %s19, %s823
        $region104: #{gnn_forward.1} parent=51 // pred_fallthru
          _
        // Predicated region
        $region105: #{gnn_forward.1} parent=51 // pred_check
          %p825 = pneg %p538
        $region106: #{gnn_forward.1} parent=51 // pred_check_branch
          %827 = sbr.rel (%p825) target = $region108
        $region107: #{gnn_forward.1} parent=51 // pred_region
          %p828 = scmp.lt.s32.totalorder %s33, 4
          %s829 = scalar_select %p828, %s33, 4
          %s830 = smul.addr %s829, 16
          %s831 = smul.addr %s830, 4
          %s832 = scalar_lea.vmem %s20, %s831
        $region108: #{gnn_forward.1} parent=51 // pred_fallthru
          _
        // Predicated region
        $region109: #{gnn_forward.1} parent=51 // pred_check
          %p833 = pneg %p564
        $region110: #{gnn_forward.1} parent=51 // pred_check_branch
          %835 = sbr.rel (%p833) target = $region112
        $region111: #{gnn_forward.1} parent=51 // pred_region
          %p836 = scmp.lt.s32.totalorder %s33, 4
          %s837 = scalar_select %p836, %s33, 4
          %s838 = scalar_lea.vmem %s21, %s837
        $region112: #{gnn_forward.1} parent=51 // pred_fallthru
          _
        // Predicated region
        $region113: #{gnn_forward.1} parent=51 // pred_check
          %p839 = pneg %p590
        $region114: #{gnn_forward.1} parent=51 // pred_check_branch
          %841 = sbr.rel (%p839) target = $region116
        $region115: #{gnn_forward.1} parent=51 // pred_region
          %p842 = scmp.lt.s32.totalorder %s33, 4
          %s843 = scalar_select %p842, %s33, 4
          %s844 = scalar_lea.vmem %s22, %s843
        $region116: #{gnn_forward.1} parent=51 // pred_fallthru
          _
        // Predicated region
        $region117: #{gnn_forward.1} parent=51 // pred_check
          %p845 = pneg %p616
        $region118: #{gnn_forward.1} parent=51 // pred_check_branch
          %847 = sbr.rel (%p845) target = $region120
        $region119: #{gnn_forward.1} parent=51 // pred_region
          %p848 = scmp.lt.s32.totalorder %s33, 4
          %s849 = scalar_select %p848, %s33, 4
          %s850 = scalar_lea.vmem %s23, %s849
        $region120: #{gnn_forward.1} parent=51 // pred_fallthru
          _
      $region52: #{gnn_forward.1} parent=5 // pred_fallthru
        _
      %p851 = scmp.le.s32.totalorder 1, %s33
      %p852 = scmp.lt.s32.totalorder %s33, 6
      %p853 = pnand %p851, %p852
      %p854 = pneg %p853
      // Predicated region
      $region121: #{gnn_forward.1} parent=5 // pred_check
        _
      $region122: #{gnn_forward.1} parent=5 // pred_check_branch
        %856 = sbr.rel (%p853) target = $region124
      $region123: #{gnn_forward.1} parent=5 // pred_region
        %s857 = ssub.s32 %s33, 1
        // Predicated region
        $region125: #{gnn_forward.1} parent=123 // pred_check
          %p858 = pneg %p54
        $region126: #{gnn_forward.1} parent=123 // pred_check_branch
          %860 = sbr.rel (%p858) target = $region128
        $region127: #{gnn_forward.1} parent=123 // pred_region
          %861 = dma.done [#allocation5], 16
        $region128: #{gnn_forward.1} parent=123 // pred_fallthru
          _
        %862 = sfence
        %p863 = pneg %p54
        %p864 = pneg %p51
        %p865 = pneg %p75
        %p866 = pneg %p72
        %p867 = pneg %p96
        %p868 = pneg %p93
        %p869 = pneg %p117
        %p870 = pneg %p114
        %p871 = pneg %p138
        %p872 = pneg %p135
        %p873 = pneg %p159
        %p874 = pneg %p156
        %p875 = pneg %p180
        %p876 = pneg %p177
        %p877 = scmp.lt.s32.totalorder %s38, 4
        %s878 = scalar_select %p877, %s38, 4
        %s879 = smul.addr %s878, 4
        %s880 = smul.addr %s879, 8
        %s881 = scalar_lea.vmem %s7, %s880
        %p882 = pneg %p206
        %p883 = pneg %p203
        %p884 = scmp.lt.s32.totalorder %s38, 4
        %s885 = scalar_select %p884, %s38, 4
        %s886 = smul.addr %s885, 16
        %s887 = smul.addr %s886, 4
        %s888 = scalar_lea.vmem %s8, %s887
        %p889 = pneg %p232
        %p890 = pneg %p229
        %p891 = scmp.lt.s32.totalorder %s38, 4
        %s892 = scalar_select %p891, %s38, 4
        %s893 = scalar_lea.vmem %s9, %s892
        %p894 = pneg %p258
        %p895 = pneg %p255
        %p896 = scmp.lt.s32.totalorder %s38, 4
        %s897 = scalar_select %p896, %s38, 4
        %s898 = scalar_lea.vmem %s10, %s897
        %p899 = pneg %p284
        %p900 = pneg %p281
        %p901 = scmp.lt.s32.totalorder %s38, 4
        %s902 = scalar_select %p901, %s38, 4
        %s903 = scalar_lea.vmem %s11, %s902
        %p904 = pneg %p310
        %p905 = pneg %p307
        %p906 = scmp.lt.s32.totalorder %s38, 4
        %s907 = scalar_select %p906, %s38, 4
        %s908 = smul.addr %s907, 16
        %s909 = smul.addr %s908, 4
        %s910 = scalar_lea.vmem %s12, %s909
        %p911 = pneg %p336
        %p912 = pneg %p333
        %p913 = scmp.lt.s32.totalorder %s38, 4
        %s914 = scalar_select %p913, %s38, 4
        %s915 = scalar_lea.vmem %s13, %s914
        %p916 = pneg %p362
        %p917 = pneg %p359
        %p918 = scmp.lt.s32.totalorder %s38, 4
        %s919 = scalar_select %p918, %s38, 4
        %s920 = scalar_lea.vmem %s14, %s919
        %p921 = pneg %p388
        %p922 = pneg %p385
        %p923 = scmp.lt.s32.totalorder %s38, 4
        %s924 = scalar_select %p923, %s38, 4
        %s925 = scalar_lea.vmem %s15, %s924
        %p926 = pneg %p414
        %p927 = pneg %p411
        %p928 = scmp.lt.s32.totalorder %s38, 4
        %s929 = scalar_select %p928, %s38, 4
        %s930 = smul.addr %s929, 16
        %s931 = smul.addr %s930, 4
        %s932 = scalar_lea.vmem %s16, %s931
        %p933 = pneg %p440
        %p934 = pneg %p437
        %p935 = scmp.lt.s32.totalorder %s38, 4
        %s936 = scalar_select %p935, %s38, 4
        %s937 = scalar_lea.vmem %s17, %s936
        %p938 = pneg %p466
        %p939 = pneg %p463
        %p940 = scmp.lt.s32.totalorder %s38, 4
        %s941 = scalar_select %p940, %s38, 4
        %s942 = scalar_lea.vmem %s18, %s941
        %p943 = pneg %p492
        %p944 = pneg %p489
        %p945 = scmp.lt.s32.totalorder %s38, 4
        %s946 = scalar_select %p945, %s38, 4
        %s947 = scalar_lea.vmem %s19, %s946
        %p948 = pneg %p518
        %p949 = pneg %p515
        %p950 = scmp.lt.s32.totalorder %s38, 4
        %s951 = scalar_select %p950, %s38, 4
        %s952 = smul.addr %s951, 16
        %s953 = smul.addr %s952, 4
        %s954 = scalar_lea.vmem %s20, %s953
        %p955 = pneg %p544
        %p956 = pneg %p541
        %p957 = scmp.lt.s32.totalorder %s38, 4
        %s958 = scalar_select %p957, %s38, 4
        %s959 = scalar_lea.vmem %s21, %s958
        %p960 = pneg %p570
        %p961 = pneg %p567
        %p962 = scmp.lt.s32.totalorder %s38, 4
        %s963 = scalar_select %p962, %s38, 4
        %s964 = scalar_lea.vmem %s22, %s963
        %p965 = pneg %p596
        %p966 = pneg %p593
        %p967 = scmp.lt.s32.totalorder %s38, 4
        %s968 = scalar_select %p967, %s38, 4
        %s969 = scalar_lea.vmem %s23, %s968
        %p970 = pneg %p622
        %p971 = pneg %p619
        %p972 = pneg %p643
        %p973 = pneg %p640
        %p974 = pneg %p664
        %p975 = pneg %p661
        %p976 = pneg %p685
        %p977 = pneg %p682
        %p978 = scmp.lt.s32.totalorder %s38, 4
        %s979 = scalar_select %p978, %s38, 4
        %s980 = smul.addr %s979, 4
        %s981 = smul.addr %s980, 8
        %s982 = scalar_lea.vmem %s7, %s981
        %p983 = scmp.lt.s32.totalorder %s38, 4
        %s984 = scalar_select %p983, %s38, 4
        %s985 = smul.addr %s984, 16
        %s986 = smul.addr %s985, 4
        %s987 = scalar_lea.vmem %s8, %s986
        %p988 = scmp.lt.s32.totalorder %s38, 4
        %s989 = scalar_select %p988, %s38, 4
        %s990 = scalar_lea.vmem %s9, %s989
        %p991 = scmp.lt.s32.totalorder %s38, 4
        %s992 = scalar_select %p991, %s38, 4
        %s993 = scalar_lea.vmem %s10, %s992
        %p994 = scmp.lt.s32.totalorder %s38, 4
        %s995 = scalar_select %p994, %s38, 4
        %s996 = scalar_lea.vmem %s11, %s995
        %p997 = scmp.lt.s32.totalorder %s38, 4
        %s998 = scalar_select %p997, %s38, 4
        %s999 = smul.addr %s998, 16
        %s1000 = smul.addr %s999, 4
        %s1001 = scalar_lea.vmem %s12, %s1000
        %p1002 = scmp.lt.s32.totalorder %s38, 4
        %s1003 = scalar_select %p1002, %s38, 4
        %s1004 = scalar_lea.vmem %s13, %s1003
        %p1005 = scmp.lt.s32.totalorder %s38, 4
        %s1006 = scalar_select %p1005, %s38, 4
        %s1007 = scalar_lea.vmem %s14, %s1006
        %p1008 = scmp.lt.s32.totalorder %s38, 4
        %s1009 = scalar_select %p1008, %s38, 4
        %s1010 = scalar_lea.vmem %s15, %s1009
        %p1011 = scmp.lt.s32.totalorder %s38, 4
        %s1012 = scalar_select %p1011, %s38, 4
        %s1013 = smul.addr %s1012, 16
        %s1014 = smul.addr %s1013, 4
        %s1015 = scalar_lea.vmem %s16, %s1014
        %p1016 = scmp.lt.s32.totalorder %s38, 4
        %s1017 = scalar_select %p1016, %s38, 4
        %s1018 = scalar_lea.vmem %s17, %s1017
        %p1019 = scmp.lt.s32.totalorder %s38, 4
        %s1020 = scalar_select %p1019, %s38, 4
        %s1021 = scalar_lea.vmem %s18, %s1020
        %p1022 = scmp.lt.s32.totalorder %s38, 4
        %s1023 = scalar_select %p1022, %s38, 4
        %s1024 = scalar_lea.vmem %s19, %s1023
        %p1025 = scmp.lt.s32.totalorder %s38, 4
        %s1026 = scalar_select %p1025, %s38, 4
        %s1027 = smul.addr %s1026, 16
        %s1028 = smul.addr %s1027, 4
        %s1029 = scalar_lea.vmem %s20, %s1028
        %p1030 = scmp.lt.s32.totalorder %s38, 4
        %s1031 = scalar_select %p1030, %s38, 4
        %s1032 = scalar_lea.vmem %s21, %s1031
        %p1033 = scmp.lt.s32.totalorder %s38, 4
        %s1034 = scalar_select %p1033, %s38, 4
        %s1035 = scalar_lea.vmem %s22, %s1034
        %p1036 = scmp.lt.s32.totalorder %s38, 4
        %s1037 = scalar_select %p1036, %s38, 4
        %s1038 = scalar_lea.vmem %s23, %s1037
        %p1040 = scmp.eq.s32.totalorder %s38, 0
        // Predicated region
        $region129: #{gnn_forward.1} parent=123 // pred_check
          %p1041 = pneg %p1040
        $region130: #{gnn_forward.1} parent=123 // pred_check_branch
          %1043 = sbr.rel (%p1041) target = $region132
        $region131: #{gnn_forward.1} parent=123 // pred_region
          %v1044 = vld [vmem:[%s1] sm:$0xff]
          %v1045 = vld [vmem:[%s1 + $0x8] sm:$0xff]
          %1046 = vst [vmem:[#allocation2] sm:$0xff] %v1044
          %1047 = vst [vmem:[#allocation2 + $0x8] sm:$0xff] %v1045
          %1048 = vst [vmem:[#allocation3] sm:$0xff] 0.0
        $region132: #{gnn_forward.1} parent=123 // pred_fallthru
          _
        %v1049 = vld [vmem:[#allocation3] sm:$0xff]
        %v1050 = vld [vmem:[#allocation2] sm:$0xff]
        %v1051 = vld [vmem:[#allocation2 + $0x8] sm:$0xff]
        %v1052 = vld [vmem:[%s4] sm:$0xf]
        %v1053 = vld [vmem:[%s4 + $0x4] sm:$0xf]
        %v1054 = vpack.c.bf16 %v1049, %v1049
        %v1057 = vunpack.c.l.b16 %v1052
        %v1058 = vunpack.c.l.b16 %v1053
        %v1059 = vpack.c.b16 %v1058, %v1057
        %vm1060 = vcmask 64512
        %v1062 = vsel %vm1060, %v1059, 0
        %vm1064 = vcmask 1043456
        %v1066 = vsel %vm1064, %v1054, 0
        %1068 = vmatprep.subr.bf16.mxu0 0
        %1069 = vmatpush1.bf16.msra.mxu0 0
        %1070 = vmatprep.subr.bf16.mxu0 0
        %1071 = vmatpush1.bf16.msra.mxu0 0
        %1072 = vmatprep.subr.bf16.mxu0 0
        %1073 = vmatpush1.bf16.msra.mxu0 0
        %1074 = vmatprep.subr.bf16.mxu0 0
        %1075 = vmatpush1.bf16.msra.mxu0 0
        %1076 = vmatprep.subr.bf16.mxu0 0
        %1077 = vmatpush1.bf16.msra.mxu0 0
        %1078 = vmatprep.subr.bf16.mxu0 0
        %1079 = vmatpush1.bf16.msra.mxu0 0
        %1080 = vmatprep.subr.bf16.mxu0 0
        %1081 = vmatpush1.bf16.msra.mxu0 0
        %1082 = vmatprep.subr.bf16.mxu0 0
        %1083 = vmatpush1.bf16.msra.mxu0 %v1066
        %1084 = vmatprep.subr.bf16.mxu0 0
        %1085 = vmatpush2.bf16.msra.mxu0 0
        %1086 = vmatprep.subr.bf16.mxu0 0
        %1087 = vmatpush2.bf16.msra.mxu0 0
        %1088 = vmatprep.subr.bf16.mxu0 0
        %1089 = vmatpush2.bf16.msra.mxu0 0
        %1090 = vmatprep.subr.bf16.mxu0 0
        %1091 = vmatpush2.bf16.msra.mxu0 0
        %1092 = vmatprep.subr.bf16.mxu0 0
        %1093 = vmatpush2.bf16.msra.mxu0 0
        %1094 = vmatprep.subr.bf16.mxu0 0
        %1095 = vmatpush2.bf16.msra.mxu0 0
        %1096 = vmatprep.subr.bf16.mxu0 0
        %1097 = vmatpush2.bf16.msra.mxu0 0
        %1098 = vmatprep.subr.bf16.mxu0 0
        %1099 = vmatpush2.bf16.msra.mxu0 0
        %1100 = vmatprep.mubr.bf16.mxu0 0
        %1101 = vmatmul.mubr.bf16.gmra.mxu0 %v1062
        %v1102 = vpop.f32.mrf.mxu0
        %v1103 = vadd.f32 0.0, %v1102
        %v1104 = vpop.f32.mrf.mxu0
        %v1105 = vpop.f32.mrf.mxu0
        %v1106 = vadd.f32 0.0, %v1105
        %v1107 = vpop.f32.mrf.mxu0
        %1108 = vdwg.mxu0
        %v1109 = vadd.f32 %v1050, %v1103
        %v1110 = vadd.f32 %v1051, %v1106
        %v1111 = vpack.c.bf16 %v1110, %v1109
        %p1112 = scmp.lt.s32.totalorder %s38, 4
        // Predicated region
        $region133: #{gnn_forward.1} parent=123 // pred_check
          %p1113 = pneg %p1112
        $region134: #{gnn_forward.1} parent=123 // pred_check_branch
          %1115 = sbr.rel (%p1113) target = $region136
        $region135: #{gnn_forward.1} parent=123 // pred_region
          %v1116 = vld [vmem:[%s5] sm:$0xf]
          %vm1117 = vcmask 130048
          %v1119 = vsel %vm1117, %v1116, 0
          %1121 = vmatprep.subr.bf16.mxu0 0
          %1122 = vmatpush1.bf16.msra.mxu0 0
          %1123 = vmatprep.subr.bf16.mxu0 0
          %1124 = vmatpush1.bf16.msra.mxu0 0
          %1125 = vmatprep.subr.bf16.mxu0 0
          %1126 = vmatpush1.bf16.msra.mxu0 0
          %1127 = vmatprep.subr.bf16.mxu0 0
          %1128 = vmatpush1.bf16.msra.mxu0 0
          %1129 = vmatprep.subr.bf16.mxu0 0
          %1130 = vmatpush1.bf16.msra.mxu0 0
          %1131 = vmatprep.subr.bf16.mxu0 0
          %1132 = vmatpush1.bf16.msra.mxu0 0
          %1133 = vmatprep.subr.bf16.mxu0 0
          %1134 = vmatpush1.bf16.msra.mxu0 0
          %1135 = vmatprep.subr.bf16.mxu0 0
          %1136 = vmatpush1.bf16.msra.mxu0 %v1111
          %1137 = vmatprep.subr.bf16.mxu0 0
          %1138 = vmatpush2.bf16.msra.mxu0 0
          %1139 = vmatprep.subr.bf16.mxu0 0
          %1140 = vmatpush2.bf16.msra.mxu0 0
          %1141 = vmatprep.subr.bf16.mxu0 0
          %1142 = vmatpush2.bf16.msra.mxu0 0
          %1143 = vmatprep.subr.bf16.mxu0 0
          %1144 = vmatpush2.bf16.msra.mxu0 0
          %1145 = vmatprep.subr.bf16.mxu0 0
          %1146 = vmatpush2.bf16.msra.mxu0 0
          %1147 = vmatprep.subr.bf16.mxu0 0
          %1148 = vmatpush2.bf16.msra.mxu0 0
          %1149 = vmatprep.subr.bf16.mxu0 0
          %1150 = vmatpush2.bf16.msra.mxu0 0
          %1151 = vmatprep.subr.bf16.mxu0 0
          %1152 = vmatpush2.bf16.msra.mxu0 0
          %1153 = vmatprep.mubr.bf16.mxu0 0
          %1154 = vmatmul.mubr.bf16.gmra.mxu0 %v1119
          %v1155 = vpop.f32.mrf.mxu0
          %v1156 = vadd.f32 %v1049, %v1155
          %v1157 = vpop.f32.mrf.mxu0
          %v1158 = vpop.f32.mrf.mxu0
          %v1159 = vpop.f32.mrf.mxu0
          %1160 = vdwg.mxu0
          %v1161 = vpack.c.bf16 %v1156, %v1156
          %v1162 = vld [vmem:[%s1015] sm:$0xf]
          %v1163 = vld [vmem:[%s1015 + $0x4] sm:$0xf]
          %v1164 = vld [vmem:[%s1015 + $0x8] sm:$0xf]
          %v1165 = vld [vmem:[%s1015 + $0xc] sm:$0xf]
          %v1166 = vld [vmem:[%s1015 + $0x10] sm:$0xf]
          %v1167 = vld [vmem:[%s1015 + $0x14] sm:$0xf]
          %v1168 = vld [vmem:[%s1015 + $0x18] sm:$0xf]
          %v1169 = vld [vmem:[%s1015 + $0x1c] sm:$0xf]
          %v1170 = vld [vmem:[%s1015 + $0x20] sm:$0xf]
          %v1171 = vld [vmem:[%s1015 + $0x24] sm:$0xf]
          %v1172 = vld [vmem:[%s1015 + $0x28] sm:$0xf]
          %v1173 = vld [vmem:[%s1015 + $0x2c] sm:$0xf]
          %v1174 = vld [vmem:[%s1015 + $0x30] sm:$0xf]
          %v1175 = vld [vmem:[%s1015 + $0x34] sm:$0xf]
          %v1176 = vld [vmem:[%s1015 + $0x38] sm:$0xf]
          %v1177 = vld [vmem:[%s1015 + $0x3c] sm:$0xf]
          %v1178 = vld [vmem:[%s1018] sm:$0x1]
          %v1180 = vlaneseq
          %v1181 = vshrl.u32 %v1180, 7
          %v1182 = vsub.s32 0, %v1181
          %v1183 = vrot.slane %v1178, %v1182
          %v1201 = vunpack.c.l.b16 %v1162
          %v1202 = vunpack.c.l.b16 %v1163
          %v1203 = vunpack.c.l.b16 %v1164
          %v1204 = vunpack.c.l.b16 %v1165
          %v1205 = vunpack.c.l.b16 %v1166
          %v1206 = vunpack.c.l.b16 %v1167
          %v1207 = vunpack.c.l.b16 %v1168
          %v1208 = vunpack.c.l.b16 %v1169
          %v1209 = vunpack.c.l.b16 %v1170
          %v1210 = vunpack.c.l.b16 %v1171
          %v1211 = vunpack.c.l.b16 %v1172
          %v1212 = vunpack.c.l.b16 %v1173
          %v1213 = vunpack.c.l.b16 %v1174
          %v1214 = vunpack.c.l.b16 %v1175
          %v1215 = vunpack.c.l.b16 %v1176
          %v1216 = vunpack.c.l.b16 %v1177
          %v1217 = vpack.c.b16 %v1202, %v1201
          %v1218 = vpack.c.b16 %v1204, %v1203
          %v1219 = vpack.c.b16 %v1206, %v1205
          %v1220 = vpack.c.b16 %v1208, %v1207
          %v1221 = vpack.c.b16 %v1210, %v1209
          %v1222 = vpack.c.b16 %v1212, %v1211
          %v1223 = vpack.c.b16 %v1214, %v1213
          %v1224 = vpack.c.b16 %v1216, %v1215
          %1233 = vmatprep.subr.bf16.mxu0 0
          %1234 = vmatpush1.bf16.msra.mxu0 %v1224
          %1235 = vmatprep.subr.bf16.mxu0 0
          %1236 = vmatpush1.bf16.msra.mxu0 %v1223
          %1237 = vmatprep.subr.bf16.mxu0 0
          %1238 = vmatpush1.bf16.msra.mxu0 %v1222
          %1239 = vmatprep.subr.bf16.mxu0 0
          %1240 = vmatpush1.bf16.msra.mxu0 %v1221
          %1241 = vmatprep.subr.bf16.mxu0 0
          %1242 = vmatpush1.bf16.msra.mxu0 %v1220
          %1243 = vmatprep.subr.bf16.mxu0 0
          %1244 = vmatpush1.bf16.msra.mxu0 %v1219
          %1245 = vmatprep.subr.bf16.mxu0 0
          %1246 = vmatpush1.bf16.msra.mxu0 %v1218
          %1247 = vmatprep.subr.bf16.mxu0 0
          %1248 = vmatpush1.bf16.msra.mxu0 %v1217
          %1249 = vmatprep.subr.bf16.mxu0 0
          %1250 = vmatpush2.bf16.msra.mxu0 0
          %1251 = vmatprep.subr.bf16.mxu0 0
          %1252 = vmatpush2.bf16.msra.mxu0 0
          %1253 = vmatprep.subr.bf16.mxu0 0
          %1254 = vmatpush2.bf16.msra.mxu0 0
          %1255 = vmatprep.subr.bf16.mxu0 0
          %1256 = vmatpush2.bf16.msra.mxu0 0
          %1257 = vmatprep.subr.bf16.mxu0 0
          %1258 = vmatpush2.bf16.msra.mxu0 0
          %1259 = vmatprep.subr.bf16.mxu0 0
          %1260 = vmatpush2.bf16.msra.mxu0 0
          %1261 = vmatprep.subr.bf16.mxu0 0
          %1262 = vmatpush2.bf16.msra.mxu0 0
          %1263 = vmatprep.subr.bf16.mxu0 0
          %1264 = vmatpush2.bf16.msra.mxu0 0
          %1265 = vmatprep.mubr.bf16.mxu0 0
          %1266 = vmatmul.mubr.bf16.gmra.mxu0 %v1161
          %v1267 = vpop.f32.mrf.mxu0
          %v1268 = vadd.f32 %v1183, %v1267
          %v1269 = vpop.f32.mrf.mxu0
          %v1270 = vpop.f32.mrf.mxu0
          %v1271 = vpop.f32.mrf.mxu0
          %1272 = vdwg.mxu0
          %v1273 = vld [vmem:[%s1021] sm:$0x1]
          %v1275 = vlaneseq
          %v1276 = vshrl.u32 %v1275, 7
          %v1277 = vsub.s32 0, %v1276
          %v1278 = vrot.slane %v1273, %v1277
          %v1280 = vmul.f32 %v1268, %v1278
          %v1281 = vld [vmem:[%s1024] sm:$0x1]
          %v1283 = vlaneseq
          %v1284 = vshrl.u32 %v1283, 7
          %v1285 = vsub.s32 0, %v1284
          %v1286 = vrot.slane %v1281, %v1285
          %v1288 = vadd.f32 %v1280, %v1286
          %v1289 = vmax.f32 %v1288, 0.0
          %v1290 = vpack.c.bf16 %v1289, %v1289
          %v1291 = vld [vmem:[%s1029] sm:$0xf]
          %v1292 = vld [vmem:[%s1029 + $0x4] sm:$0xf]
          %v1293 = vld [vmem:[%s1029 + $0x8] sm:$0xf]
          %v1294 = vld [vmem:[%s1029 + $0xc] sm:$0xf]
          %v1295 = vld [vmem:[%s1029 + $0x10] sm:$0xf]
          %v1296 = vld [vmem:[%s1029 + $0x14] sm:$0xf]
          %v1297 = vld [vmem:[%s1029 + $0x18] sm:$0xf]
          %v1298 = vld [vmem:[%s1029 + $0x1c] sm:$0xf]
          %v1299 = vld [vmem:[%s1029 + $0x20] sm:$0xf]
          %v1300 = vld [vmem:[%s1029 + $0x24] sm:$0xf]
          %v1301 = vld [vmem:[%s1029 + $0x28] sm:$0xf]
          %v1302 = vld [vmem:[%s1029 + $0x2c] sm:$0xf]
          %v1303 = vld [vmem:[%s1029 + $0x30] sm:$0xf]
          %v1304 = vld [vmem:[%s1029 + $0x34] sm:$0xf]
          %v1305 = vld [vmem:[%s1029 + $0x38] sm:$0xf]
          %v1306 = vld [vmem:[%s1029 + $0x3c] sm:$0xf]
          %v1307 = vld [vmem:[%s1032] sm:$0x1]
          %v1309 = vlaneseq
          %v1310 = vshrl.u32 %v1309, 7
          %v1311 = vsub.s32 0, %v1310
          %v1312 = vrot.slane %v1307, %v1311
          %v1330 = vunpack.c.l.b16 %v1291
          %v1331 = vunpack.c.l.b16 %v1292
          %v1332 = vunpack.c.l.b16 %v1293
          %v1333 = vunpack.c.l.b16 %v1294
          %v1334 = vunpack.c.l.b16 %v1295
          %v1335 = vunpack.c.l.b16 %v1296
          %v1336 = vunpack.c.l.b16 %v1297
          %v1337 = vunpack.c.l.b16 %v1298
          %v1338 = vunpack.c.l.b16 %v1299
          %v1339 = vunpack.c.l.b16 %v1300
          %v1340 = vunpack.c.l.b16 %v1301
          %v1341 = vunpack.c.l.b16 %v1302
          %v1342 = vunpack.c.l.b16 %v1303
          %v1343 = vunpack.c.l.b16 %v1304
          %v1344 = vunpack.c.l.b16 %v1305
          %v1345 = vunpack.c.l.b16 %v1306
          %v1346 = vpack.c.b16 %v1331, %v1330
          %v1347 = vpack.c.b16 %v1333, %v1332
          %v1348 = vpack.c.b16 %v1335, %v1334
          %v1349 = vpack.c.b16 %v1337, %v1336
          %v1350 = vpack.c.b16 %v1339, %v1338
          %v1351 = vpack.c.b16 %v1341, %v1340
          %v1352 = vpack.c.b16 %v1343, %v1342
          %v1353 = vpack.c.b16 %v1345, %v1344
          %1362 = vmatprep.subr.bf16.mxu0 0
          %1363 = vmatpush1.bf16.msra.mxu0 %v1353
          %1364 = vmatprep.subr.bf16.mxu0 0
          %1365 = vmatpush1.bf16.msra.mxu0 %v1352
          %1366 = vmatprep.subr.bf16.mxu0 0
          %1367 = vmatpush1.bf16.msra.mxu0 %v1351
          %1368 = vmatprep.subr.bf16.mxu0 0
          %1369 = vmatpush1.bf16.msra.mxu0 %v1350
          %1370 = vmatprep.subr.bf16.mxu0 0
          %1371 = vmatpush1.bf16.msra.mxu0 %v1349
          %1372 = vmatprep.subr.bf16.mxu0 0
          %1373 = vmatpush1.bf16.msra.mxu0 %v1348
          %1374 = vmatprep.subr.bf16.mxu0 0
          %1375 = vmatpush1.bf16.msra.mxu0 %v1347
          %1376 = vmatprep.subr.bf16.mxu0 0
          %1377 = vmatpush1.bf16.msra.mxu0 %v1346
          %1378 = vmatprep.subr.bf16.mxu0 0
          %1379 = vmatpush2.bf16.msra.mxu0 0
          %1380 = vmatprep.subr.bf16.mxu0 0
          %1381 = vmatpush2.bf16.msra.mxu0 0
          %1382 = vmatprep.subr.bf16.mxu0 0
          %1383 = vmatpush2.bf16.msra.mxu0 0
          %1384 = vmatprep.subr.bf16.mxu0 0
          %1385 = vmatpush2.bf16.msra.mxu0 0
          %1386 = vmatprep.subr.bf16.mxu0 0
          %1387 = vmatpush2.bf16.msra.mxu0 0
          %1388 = vmatprep.subr.bf16.mxu0 0
          %1389 = vmatpush2.bf16.msra.mxu0 0
          %1390 = vmatprep.subr.bf16.mxu0 0
          %1391 = vmatpush2.bf16.msra.mxu0 0
          %1392 = vmatprep.subr.bf16.mxu0 0
          %1393 = vmatpush2.bf16.msra.mxu0 0
          %1394 = vmatprep.mubr.bf16.mxu0 0
          %1395 = vmatmul.mubr.bf16.gmra.mxu0 %v1290
          %v1396 = vpop.f32.mrf.mxu0
          %v1397 = vadd.f32 %v1312, %v1396
          %v1398 = vpop.f32.mrf.mxu0
          %v1399 = vpop.f32.mrf.mxu0
          %v1400 = vpop.f32.mrf.mxu0
          %1401 = vdwg.mxu0
          %v1402 = vld [vmem:[%s1035] sm:$0x1]
          %v1404 = vlaneseq
          %v1405 = vshrl.u32 %v1404, 7
          %v1406 = vsub.s32 0, %v1405
          %v1407 = vrot.slane %v1402, %v1406
          %v1409 = vmul.f32 %v1397, %v1407
          %v1410 = vld [vmem:[%s1038] sm:$0x1]
          %v1412 = vlaneseq
          %v1413 = vshrl.u32 %v1412, 7
          %v1414 = vsub.s32 0, %v1413
          %v1415 = vrot.slane %v1410, %v1414
          %v1417 = vadd.f32 %v1409, %v1415
          %v1418 = vmax.f32 %v1417, 0.0
          %1419 = vst [vmem:[#allocation3] sm:$0xff] %v1418
        $region136: #{gnn_forward.1} parent=123 // pred_fallthru
          _
        %v1420 = vld [vmem:[%s2] sm:$0xf]
        %v1421 = vld [vmem:[%s2 + $0x4] sm:$0xf]
        %v1422 = vld [vmem:[%s2 + $0x8] sm:$0xf]
        %v1423 = vld [vmem:[%s2 + $0xc] sm:$0xf]
        %v1424 = vld [vmem:[%s982] sm:$0xff]
        %v1425 = vld [vmem:[%s982 + $0x8] sm:$0xff]
        %v1426 = vld [vmem:[%s982 + $0x10] sm:$0xff]
        %v1427 = vld [vmem:[%s982 + $0x18] sm:$0xff]
        %v1432 = vunpack.c.l.b16 %v1420
        %v1433 = vunpack.c.l.b16 %v1421
        %v1434 = vunpack.c.l.b16 %v1422
        %v1435 = vunpack.c.l.b16 %v1423
        %v1436 = vpack.c.b16 %v1433, %v1432
        %v1437 = vpack.c.b16 %v1435, %v1434
        %vm1438 = vcmask 130048
        %v1440 = vsel %vm1438, %v1436, 0
        %v1443 = vsel %vm1438, %v1437, 0
        %1445 = vmatprep.subr.bf16.mxu0 0
        %1446 = vmatpush1.bf16.msra.mxu0 0
        %1447 = vmatprep.subr.bf16.mxu0 0
        %1448 = vmatpush1.bf16.msra.mxu0 0
        %1449 = vmatprep.subr.bf16.mxu0 0
        %1450 = vmatpush1.bf16.msra.mxu0 0
        %1451 = vmatprep.subr.bf16.mxu0 0
        %1452 = vmatpush1.bf16.msra.mxu0 0
        %1453 = vmatprep.subr.bf16.mxu0 0
        %1454 = vmatpush1.bf16.msra.mxu0 0
        %1455 = vmatprep.subr.bf16.mxu0 0
        %1456 = vmatpush1.bf16.msra.mxu0 0
        %1457 = vmatprep.subr.bf16.mxu0 0
        %1458 = vmatpush1.bf16.msra.mxu0 0
        %1459 = vmatprep.subr.bf16.mxu0 0
        %1460 = vmatpush1.bf16.msra.mxu0 %v1111
        %1461 = vmatprep.subr.bf16.mxu0 0
        %1462 = vmatpush2.bf16.msra.mxu0 0
        %1463 = vmatprep.subr.bf16.mxu0 0
        %1464 = vmatpush2.bf16.msra.mxu0 0
        %1465 = vmatprep.subr.bf16.mxu0 0
        %1466 = vmatpush2.bf16.msra.mxu0 0
        %1467 = vmatprep.subr.bf16.mxu0 0
        %1468 = vmatpush2.bf16.msra.mxu0 0
        %1469 = vmatprep.subr.bf16.mxu0 0
        %1470 = vmatpush2.bf16.msra.mxu0 0
        %1471 = vmatprep.subr.bf16.mxu0 0
        %1472 = vmatpush2.bf16.msra.mxu0 0
        %1473 = vmatprep.subr.bf16.mxu0 0
        %1474 = vmatpush2.bf16.msra.mxu0 0
        %1475 = vmatprep.subr.bf16.mxu0 0
        %1476 = vmatpush2.bf16.msra.mxu0 0
        %1477 = vmatprep.mubr.bf16.mxu0 0
        %1478 = vmatmul.mubr.bf16.gmra.mxu0 %v1440
        %v1479 = vpop.f32.mrf.mxu0
        %v1480 = vadd.f32 %v1424, %v1479
        %v1481 = vpop.f32.mrf.mxu0
        %v1482 = vpop.f32.mrf.mxu0
        %v1483 = vadd.f32 %v1425, %v1482
        %v1484 = vpop.f32.mrf.mxu0
        %1485 = vmatprep.mubr.bf16.mxu0 0
        %1486 = vmatmul.mubr.bf16.gmra.mxu0 %v1443
        %v1487 = vpop.f32.mrf.mxu0
        %v1488 = vadd.f32 %v1426, %v1487
        %v1489 = vpop.f32.mrf.mxu0
        %v1490 = vpop.f32.mrf.mxu0
        %v1491 = vadd.f32 %v1427, %v1490
        %v1492 = vpop.f32.mrf.mxu0
        %1493 = vdwg.mxu0
        %v1494 = vmax.f32 %v1480, 0.0
        %v1495 = vmax.f32 %v1483, 0.0
        %v1496 = vmax.f32 %v1488, 0.0
        %v1497 = vmax.f32 %v1491, 0.0
        %v1498 = vld [vmem:[%s3] sm:$0xf]
        %v1499 = vld [vmem:[%s3 + $0x4] sm:$0xf]
        %v1500 = vpack.c.bf16 %v1495, %v1494
        %v1501 = vpack.c.bf16 %v1497, %v1496
        %v1504 = vunpack.c.l.b16 %v1498
        %v1505 = vunpack.c.l.b16 %v1499
        %v1506 = vpack.c.b16 %v1505, %v1504
        %vm1507 = vcmask 261120
        %v1509 = vsel %vm1507, %v1506, 0
        %1511 = vmatprep.subr.bf16.mxu0 0
        %1512 = vmatpush1.bf16.msra.mxu0 0
        %1513 = vmatprep.subr.bf16.mxu0 0
        %1514 = vmatpush1.bf16.msra.mxu0 0
        %1515 = vmatprep.subr.bf16.mxu0 0
        %1516 = vmatpush1.bf16.msra.mxu0 0
        %1517 = vmatprep.subr.bf16.mxu0 0
        %1518 = vmatpush1.bf16.msra.mxu0 0
        %1519 = vmatprep.subr.bf16.mxu0 0
        %1520 = vmatpush1.bf16.msra.mxu0 0
        %1521 = vmatprep.subr.bf16.mxu0 0
        %1522 = vmatpush1.bf16.msra.mxu0 0
        %1523 = vmatprep.subr.bf16.mxu0 0
        %1524 = vmatpush1.bf16.msra.mxu0 %v1501
        %1525 = vmatprep.subr.bf16.mxu0 0
        %1526 = vmatpush1.bf16.msra.mxu0 %v1500
        %1527 = vmatprep.subr.bf16.mxu0 0
        %1528 = vmatpush2.bf16.msra.mxu0 0
        %1529 = vmatprep.subr.bf16.mxu0 0
        %1530 = vmatpush2.bf16.msra.mxu0 0
        %1531 = vmatprep.subr.bf16.mxu0 0
        %1532 = vmatpush2.bf16.msra.mxu0 0
        %1533 = vmatprep.subr.bf16.mxu0 0
        %1534 = vmatpush2.bf16.msra.mxu0 0
        %1535 = vmatprep.subr.bf16.mxu0 0
        %1536 = vmatpush2.bf16.msra.mxu0 0
        %1537 = vmatprep.subr.bf16.mxu0 0
        %1538 = vmatpush2.bf16.msra.mxu0 0
        %1539 = vmatprep.subr.bf16.mxu0 0
        %1540 = vmatpush2.bf16.msra.mxu0 0
        %1541 = vmatprep.subr.bf16.mxu0 0
        %1542 = vmatpush2.bf16.msra.mxu0 0
        %1543 = vmatprep.mubr.bf16.mxu0 0
        %1544 = vmatmul.mubr.bf16.gmra.mxu0 %v1509
        %v1545 = vpop.f32.mrf.mxu0
        %v1546 = vadd.f32 0.0, %v1545
        %v1547 = vpop.f32.mrf.mxu0
        %v1548 = vpop.f32.mrf.mxu0
        %v1549 = vadd.f32 0.0, %v1548
        %v1550 = vpop.f32.mrf.mxu0
        %1551 = vdwg.mxu0
        %s1552 = sld [smem:[#allocation4 + %s38]]
        %s1553 = sadd.f32 %s1552, 1.0
        %v1554 = vstv %s1553
        %v1555 = vmul.f32 %v1554, %v1109
        %v1556 = vmul.f32 %v1554, %v1110
        %v1557 = vadd.f32 %v1555, %v1546
        %v1558 = vadd.f32 %v1556, %v1549
        %v1559 = vpack.c.bf16 %v1558, %v1557
        %v1560 = vld [vmem:[%s987] sm:$0xf]
        %v1561 = vld [vmem:[%s987 + $0x4] sm:$0xf]
        %v1562 = vld [vmem:[%s987 + $0x8] sm:$0xf]
        %v1563 = vld [vmem:[%s987 + $0xc] sm:$0xf]
        %v1564 = vld [vmem:[%s987 + $0x10] sm:$0xf]
        %v1565 = vld [vmem:[%s987 + $0x14] sm:$0xf]
        %v1566 = vld [vmem:[%s987 + $0x18] sm:$0xf]
        %v1567 = vld [vmem:[%s987 + $0x1c] sm:$0xf]
        %v1568 = vld [vmem:[%s987 + $0x20] sm:$0xf]
        %v1569 = vld [vmem:[%s987 + $0x24] sm:$0xf]
        %v1570 = vld [vmem:[%s987 + $0x28] sm:$0xf]
        %v1571 = vld [vmem:[%s987 + $0x2c] sm:$0xf]
        %v1572 = vld [vmem:[%s987 + $0x30] sm:$0xf]
        %v1573 = vld [vmem:[%s987 + $0x34] sm:$0xf]
        %v1574 = vld [vmem:[%s987 + $0x38] sm:$0xf]
        %v1575 = vld [vmem:[%s987 + $0x3c] sm:$0xf]
        %v1576 = vld [vmem:[%s990] sm:$0x1]
        %v1578 = vlaneseq
        %v1579 = vshrl.u32 %v1578, 7
        %v1580 = vsub.s32 0, %v1579
        %v1581 = vrot.slane %v1576, %v1580
        %v1599 = vunpack.c.l.b16 %v1560
        %v1600 = vunpack.c.l.b16 %v1561
        %v1601 = vunpack.c.l.b16 %v1562
        %v1602 = vunpack.c.l.b16 %v1563
        %v1603 = vunpack.c.l.b16 %v1564
        %v1604 = vunpack.c.l.b16 %v1565
        %v1605 = vunpack.c.l.b16 %v1566
        %v1606 = vunpack.c.l.b16 %v1567
        %v1607 = vunpack.c.l.b16 %v1568
        %v1608 = vunpack.c.l.b16 %v1569
        %v1609 = vunpack.c.l.b16 %v1570
        %v1610 = vunpack.c.l.b16 %v1571
        %v1611 = vunpack.c.l.b16 %v1572
        %v1612 = vunpack.c.l.b16 %v1573
        %v1613 = vunpack.c.l.b16 %v1574
        %v1614 = vunpack.c.l.b16 %v1575
        %v1615 = vpack.c.b16 %v1600, %v1599
        %v1616 = vpack.c.b16 %v1602, %v1601
        %v1617 = vpack.c.b16 %v1604, %v1603
        %v1618 = vpack.c.b16 %v1606, %v1605
        %v1619 = vpack.c.b16 %v1608, %v1607
        %v1620 = vpack.c.b16 %v1610, %v1609
        %v1621 = vpack.c.b16 %v1612, %v1611
        %v1622 = vpack.c.b16 %v1614, %v1613
        %1631 = vmatprep.subr.bf16.mxu0 0
        %1632 = vmatpush1.bf16.msra.mxu0 %v1622
        %1633 = vmatprep.subr.bf16.mxu0 0
        %1634 = vmatpush1.bf16.msra.mxu0 %v1621
        %1635 = vmatprep.subr.bf16.mxu0 0
        %1636 = vmatpush1.bf16.msra.mxu0 %v1620
        %1637 = vmatprep.subr.bf16.mxu0 0
        %1638 = vmatpush1.bf16.msra.mxu0 %v1619
        %1639 = vmatprep.subr.bf16.mxu0 0
        %1640 = vmatpush1.bf16.msra.mxu0 %v1618
        %1641 = vmatprep.subr.bf16.mxu0 0
        %1642 = vmatpush1.bf16.msra.mxu0 %v1617
        %1643 = vmatprep.subr.bf16.mxu0 0
        %1644 = vmatpush1.bf16.msra.mxu0 %v1616
        %1645 = vmatprep.subr.bf16.mxu0 0
        %1646 = vmatpush1.bf16.msra.mxu0 %v1615
        %1647 = vmatprep.subr.bf16.mxu0 0
        %1648 = vmatpush2.bf16.msra.mxu0 0
        %1649 = vmatprep.subr.bf16.mxu0 0
        %1650 = vmatpush2.bf16.msra.mxu0 0
        %1651 = vmatprep.subr.bf16.mxu0 0
        %1652 = vmatpush2.bf16.msra.mxu0 0
        %1653 = vmatprep.subr.bf16.mxu0 0
        %1654 = vmatpush2.bf16.msra.mxu0 0
        %1655 = vmatprep.subr.bf16.mxu0 0
        %1656 = vmatpush2.bf16.msra.mxu0 0
        %1657 = vmatprep.subr.bf16.mxu0 0
        %1658 = vmatpush2.bf16.msra.mxu0 0
        %1659 = vmatprep.subr.bf16.mxu0 0
        %1660 = vmatpush2.bf16.msra.mxu0 0
        %1661 = vmatprep.subr.bf16.mxu0 0
        %1662 = vmatpush2.bf16.msra.mxu0 0
        %1663 = vmatprep.mubr.bf16.mxu0 0
        %1664 = vmatmul.mubr.bf16.gmra.mxu0 %v1559
        %v1665 = vpop.f32.mrf.mxu0
        %v1666 = vadd.f32 %v1581, %v1665
        %v1667 = vpop.f32.mrf.mxu0
        %v1668 = vpop.f32.mrf.mxu0
        %v1669 = vadd.f32 %v1581, %v1668
        %v1670 = vpop.f32.mrf.mxu0
        %1671 = vdwg.mxu0
        %v1672 = vld [vmem:[%s993] sm:$0x1]
        %v1674 = vlaneseq
        %v1675 = vshrl.u32 %v1674, 7
        %v1676 = vsub.s32 0, %v1675
        %v1677 = vrot.slane %v1672, %v1676
        %v1679 = vmul.f32 %v1666, %v1677
        %v1680 = vmul.f32 %v1669, %v1677
        %v1681 = vld [vmem:[%s996] sm:$0x1]
        %v1683 = vlaneseq
        %v1684 = vshrl.u32 %v1683, 7
        %v1685 = vsub.s32 0, %v1684
        %v1686 = vrot.slane %v1681, %v1685
        %v1688 = vadd.f32 %v1679, %v1686
        %v1689 = vadd.f32 %v1680, %v1686
        %v1690 = vmax.f32 %v1688, 0.0
        %v1691 = vmax.f32 %v1689, 0.0
        %v1692 = vpack.c.bf16 %v1691, %v1690
        %v1693 = vld [vmem:[%s1001] sm:$0xf]
        %v1694 = vld [vmem:[%s1001 + $0x4] sm:$0xf]
        %v1695 = vld [vmem:[%s1001 + $0x8] sm:$0xf]
        %v1696 = vld [vmem:[%s1001 + $0xc] sm:$0xf]
        %v1697 = vld [vmem:[%s1001 + $0x10] sm:$0xf]
        %v1698 = vld [vmem:[%s1001 + $0x14] sm:$0xf]
        %v1699 = vld [vmem:[%s1001 + $0x18] sm:$0xf]
        %v1700 = vld [vmem:[%s1001 + $0x1c] sm:$0xf]
        %v1701 = vld [vmem:[%s1001 + $0x20] sm:$0xf]
        %v1702 = vld [vmem:[%s1001 + $0x24] sm:$0xf]
        %v1703 = vld [vmem:[%s1001 + $0x28] sm:$0xf]
        %v1704 = vld [vmem:[%s1001 + $0x2c] sm:$0xf]
        %v1705 = vld [vmem:[%s1001 + $0x30] sm:$0xf]
        %v1706 = vld [vmem:[%s1001 + $0x34] sm:$0xf]
        %v1707 = vld [vmem:[%s1001 + $0x38] sm:$0xf]
        %v1708 = vld [vmem:[%s1001 + $0x3c] sm:$0xf]
        %v1709 = vld [vmem:[%s1004] sm:$0x1]
        %v1711 = vlaneseq
        %v1712 = vshrl.u32 %v1711, 7
        %v1713 = vsub.s32 0, %v1712
        %v1714 = vrot.slane %v1709, %v1713
        %v1732 = vunpack.c.l.b16 %v1693
        %v1733 = vunpack.c.l.b16 %v1694
        %v1734 = vunpack.c.l.b16 %v1695
        %v1735 = vunpack.c.l.b16 %v1696
        %v1736 = vunpack.c.l.b16 %v1697
        %v1737 = vunpack.c.l.b16 %v1698
        %v1738 = vunpack.c.l.b16 %v1699
        %v1739 = vunpack.c.l.b16 %v1700
        %v1740 = vunpack.c.l.b16 %v1701
        %v1741 = vunpack.c.l.b16 %v1702
        %v1742 = vunpack.c.l.b16 %v1703
        %v1743 = vunpack.c.l.b16 %v1704
        %v1744 = vunpack.c.l.b16 %v1705
        %v1745 = vunpack.c.l.b16 %v1706
        %v1746 = vunpack.c.l.b16 %v1707
        %v1747 = vunpack.c.l.b16 %v1708
        %v1748 = vpack.c.b16 %v1733, %v1732
        %v1749 = vpack.c.b16 %v1735, %v1734
        %v1750 = vpack.c.b16 %v1737, %v1736
        %v1751 = vpack.c.b16 %v1739, %v1738
        %v1752 = vpack.c.b16 %v1741, %v1740
        %v1753 = vpack.c.b16 %v1743, %v1742
        %v1754 = vpack.c.b16 %v1745, %v1744
        %v1755 = vpack.c.b16 %v1747, %v1746
        %1764 = vmatprep.subr.bf16.mxu0 0
        %1765 = vmatpush1.bf16.msra.mxu0 %v1755
        %1766 = vmatprep.subr.bf16.mxu0 0
        %1767 = vmatpush1.bf16.msra.mxu0 %v1754
        %1768 = vmatprep.subr.bf16.mxu0 0
        %1769 = vmatpush1.bf16.msra.mxu0 %v1753
        %1770 = vmatprep.subr.bf16.mxu0 0
        %1771 = vmatpush1.bf16.msra.mxu0 %v1752
        %1772 = vmatprep.subr.bf16.mxu0 0
        %1773 = vmatpush1.bf16.msra.mxu0 %v1751
        %1774 = vmatprep.subr.bf16.mxu0 0
        %1775 = vmatpush1.bf16.msra.mxu0 %v1750
        %1776 = vmatprep.subr.bf16.mxu0 0
        %1777 = vmatpush1.bf16.msra.mxu0 %v1749
        %1778 = vmatprep.subr.bf16.mxu0 0
        %1779 = vmatpush1.bf16.msra.mxu0 %v1748
        %1780 = vmatprep.subr.bf16.mxu0 0
        %1781 = vmatpush2.bf16.msra.mxu0 0
        %1782 = vmatprep.subr.bf16.mxu0 0
        %1783 = vmatpush2.bf16.msra.mxu0 0
        %1784 = vmatprep.subr.bf16.mxu0 0
        %1785 = vmatpush2.bf16.msra.mxu0 0
        %1786 = vmatprep.subr.bf16.mxu0 0
        %1787 = vmatpush2.bf16.msra.mxu0 0
        %1788 = vmatprep.subr.bf16.mxu0 0
        %1789 = vmatpush2.bf16.msra.mxu0 0
        %1790 = vmatprep.subr.bf16.mxu0 0
        %1791 = vmatpush2.bf16.msra.mxu0 0
        %1792 = vmatprep.subr.bf16.mxu0 0
        %1793 = vmatpush2.bf16.msra.mxu0 0
        %1794 = vmatprep.subr.bf16.mxu0 0
        %1795 = vmatpush2.bf16.msra.mxu0 0
        %1796 = vmatprep.mubr.bf16.mxu0 0
        %1797 = vmatmul.mubr.bf16.gmra.mxu0 %v1692
        %v1798 = vpop.f32.mrf.mxu0
        %v1799 = vadd.f32 %v1714, %v1798
        %v1800 = vpop.f32.mrf.mxu0
        %v1801 = vpop.f32.mrf.mxu0
        %v1802 = vadd.f32 %v1714, %v1801
        %v1803 = vpop.f32.mrf.mxu0
        %1804 = vdwg.mxu0
        %v1805 = vld [vmem:[%s1007] sm:$0x1]
        %v1807 = vlaneseq
        %v1808 = vshrl.u32 %v1807, 7
        %v1809 = vsub.s32 0, %v1808
        %v1810 = vrot.slane %v1805, %v1809
        %v1812 = vmul.f32 %v1799, %v1810
        %v1813 = vmul.f32 %v1802, %v1810
        %v1814 = vld [vmem:[%s1010] sm:$0x1]
        %v1816 = vlaneseq
        %v1817 = vshrl.u32 %v1816, 7
        %v1818 = vsub.s32 0, %v1817
        %v1819 = vrot.slane %v1814, %v1818
        %v1821 = vadd.f32 %v1812, %v1819
        %v1822 = vadd.f32 %v1813, %v1819
        %p1823 = scmp.ne.s32.totalorder %s38, 4
        // Predicated region
        $region137: #{gnn_forward.1} parent=123 // pred_check
          %p1824 = pneg %p1823
        $region138: #{gnn_forward.1} parent=123 // pred_check_branch
          %1826 = sbr.rel (%p1824) target = $region140
        $region139: #{gnn_forward.1} parent=123 // pred_region
          %v1827 = vmax.f32 %v1821, 0.0
          %v1828 = vmax.f32 %v1822, 0.0
          %1829 = vst [vmem:[#allocation2] sm:$0xff] %v1827
          %1830 = vst [vmem:[#allocation2 + $0x8] sm:$0xff] %v1828
        $region140: #{gnn_forward.1} parent=123 // pred_fallthru
          _
        %p1831 = scmp.eq.s32.totalorder %s38, 4
        // Predicated region
        $region141: #{gnn_forward.1} parent=123 // pred_check
          %p1832 = pneg %p1831
        $region142: #{gnn_forward.1} parent=123 // pred_check_branch
          %1834 = sbr.rel (%p1832) target = $region144
        $region143: #{gnn_forward.1} parent=123 // pred_region
          %v1835 = vld [vmem:[%s5] sm:$0xf]
          %v1836 = vpack.c.bf16 %v1822, %v1821
          %v1838 = vsel %vm1438, %v1835, 0
          %1840 = vmatprep.subr.bf16.mxu0 0
          %1841 = vmatpush1.bf16.msra.mxu0 0
          %1842 = vmatprep.subr.bf16.mxu0 0
          %1843 = vmatpush1.bf16.msra.mxu0 0
          %1844 = vmatprep.subr.bf16.mxu0 0
          %1845 = vmatpush1.bf16.msra.mxu0 0
          %1846 = vmatprep.subr.bf16.mxu0 0
          %1847 = vmatpush1.bf16.msra.mxu0 0
          %1848 = vmatprep.subr.bf16.mxu0 0
          %1849 = vmatpush1.bf16.msra.mxu0 0
          %1850 = vmatprep.subr.bf16.mxu0 0
          %1851 = vmatpush1.bf16.msra.mxu0 0
          %1852 = vmatprep.subr.bf16.mxu0 0
          %1853 = vmatpush1.bf16.msra.mxu0 0
          %1854 = vmatprep.subr.bf16.mxu0 0
          %1855 = vmatpush1.bf16.msra.mxu0 %v1836
          %1856 = vmatprep.subr.bf16.mxu0 0
          %1857 = vmatpush2.bf16.msra.mxu0 0
          %1858 = vmatprep.subr.bf16.mxu0 0
          %1859 = vmatpush2.bf16.msra.mxu0 0
          %1860 = vmatprep.subr.bf16.mxu0 0
          %1861 = vmatpush2.bf16.msra.mxu0 0
          %1862 = vmatprep.subr.bf16.mxu0 0
          %1863 = vmatpush2.bf16.msra.mxu0 0
          %1864 = vmatprep.subr.bf16.mxu0 0
          %1865 = vmatpush2.bf16.msra.mxu0 0
          %1866 = vmatprep.subr.bf16.mxu0 0
          %1867 = vmatpush2.bf16.msra.mxu0 0
          %1868 = vmatprep.subr.bf16.mxu0 0
          %1869 = vmatpush2.bf16.msra.mxu0 0
          %1870 = vmatprep.subr.bf16.mxu0 0
          %1871 = vmatpush2.bf16.msra.mxu0 0
          %1872 = vmatprep.mubr.bf16.mxu0 0
          %1873 = vmatmul.mubr.bf16.gmra.mxu0 %v1838
          %v1874 = vpop.f32.mrf.mxu0
          %v1875 = vadd.f32 0.0, %v1874
          %v1876 = vpop.f32.mrf.mxu0
          %v1877 = vpop.f32.mrf.mxu0
          %v1878 = vpop.f32.mrf.mxu0
          %1879 = vdwg.mxu0
          %v1880 = vld [vmem:[%s6] sm:$0xff]
          %1882 = vset.pattern.permute.xlu0 0
          %1883 = vperm.xlu0 %1882, %v1880
          %v1884 = vpop.permute.xlu0 %1883
          %v1886 = vmul.f32 %v1875, %v1884
          %v1887 = vpack.c.bf16 %v1886, %v1886
          %v1888 = vld [vmem:[%s24] sm:$0xf]
          %v1889 = vld [vmem:[%s24 + $0x4] sm:$0xf]
          %v1890 = vld [vmem:[%s24 + $0x8] sm:$0xf]
          %v1891 = vld [vmem:[%s24 + $0xc] sm:$0xf]
          %v1892 = vld [vmem:[%s24 + $0x10] sm:$0xf]
          %v1893 = vld [vmem:[%s24 + $0x14] sm:$0xf]
          %v1894 = vld [vmem:[%s24 + $0x18] sm:$0xf]
          %v1895 = vld [vmem:[%s24 + $0x1c] sm:$0xf]
          %v1896 = vld [vmem:[%s24 + $0x20] sm:$0xf]
          %v1897 = vld [vmem:[%s24 + $0x24] sm:$0xf]
          %v1898 = vld [vmem:[%s24 + $0x28] sm:$0xf]
          %v1899 = vld [vmem:[%s24 + $0x2c] sm:$0xf]
          %v1900 = vld [vmem:[%s24 + $0x30] sm:$0xf]
          %v1901 = vld [vmem:[%s24 + $0x34] sm:$0xf]
          %v1902 = vld [vmem:[%s24 + $0x38] sm:$0xf]
          %v1903 = vld [vmem:[%s24 + $0x3c] sm:$0xf]
          %v1904 = vld [vmem:[%s25] sm:$0x1]
          %v1906 = vlaneseq
          %v1907 = vshrl.u32 %v1906, 7
          %v1908 = vsub.s32 0, %v1907
          %v1909 = vrot.slane %v1904, %v1908
          %v1927 = vunpack.c.l.b16 %v1888
          %v1928 = vunpack.c.l.b16 %v1889
          %v1929 = vunpack.c.l.b16 %v1890
          %v1930 = vunpack.c.l.b16 %v1891
          %v1931 = vunpack.c.l.b16 %v1892
          %v1932 = vunpack.c.l.b16 %v1893
          %v1933 = vunpack.c.l.b16 %v1894
          %v1934 = vunpack.c.l.b16 %v1895
          %v1935 = vunpack.c.l.b16 %v1896
          %v1936 = vunpack.c.l.b16 %v1897
          %v1937 = vunpack.c.l.b16 %v1898
          %v1938 = vunpack.c.l.b16 %v1899
          %v1939 = vunpack.c.l.b16 %v1900
          %v1940 = vunpack.c.l.b16 %v1901
          %v1941 = vunpack.c.l.b16 %v1902
          %v1942 = vunpack.c.l.b16 %v1903
          %v1943 = vpack.c.b16 %v1928, %v1927
          %v1944 = vpack.c.b16 %v1930, %v1929
          %v1945 = vpack.c.b16 %v1932, %v1931
          %v1946 = vpack.c.b16 %v1934, %v1933
          %v1947 = vpack.c.b16 %v1936, %v1935
          %v1948 = vpack.c.b16 %v1938, %v1937
          %v1949 = vpack.c.b16 %v1940, %v1939
          %v1950 = vpack.c.b16 %v1942, %v1941
          %1959 = vmatprep.subr.bf16.mxu0 0
          %1960 = vmatpush1.bf16.msra.mxu0 %v1950
          %1961 = vmatprep.subr.bf16.mxu0 0
          %1962 = vmatpush1.bf16.msra.mxu0 %v1949
          %1963 = vmatprep.subr.bf16.mxu0 0
          %1964 = vmatpush1.bf16.msra.mxu0 %v1948
          %1965 = vmatprep.subr.bf16.mxu0 0
          %1966 = vmatpush1.bf16.msra.mxu0 %v1947
          %1967 = vmatprep.subr.bf16.mxu0 0
          %1968 = vmatpush1.bf16.msra.mxu0 %v1946
          %1969 = vmatprep.subr.bf16.mxu0 0
          %1970 = vmatpush1.bf16.msra.mxu0 %v1945
          %1971 = vmatprep.subr.bf16.mxu0 0
          %1972 = vmatpush1.bf16.msra.mxu0 %v1944
          %1973 = vmatprep.subr.bf16.mxu0 0
          %1974 = vmatpush1.bf16.msra.mxu0 %v1943
          %1975 = vmatprep.subr.bf16.mxu0 0
          %1976 = vmatpush2.bf16.msra.mxu0 0
          %1977 = vmatprep.subr.bf16.mxu0 0
          %1978 = vmatpush2.bf16.msra.mxu0 0
          %1979 = vmatprep.subr.bf16.mxu0 0
          %1980 = vmatpush2.bf16.msra.mxu0 0
          %1981 = vmatprep.subr.bf16.mxu0 0
          %1982 = vmatpush2.bf16.msra.mxu0 0
          %1983 = vmatprep.subr.bf16.mxu0 0
          %1984 = vmatpush2.bf16.msra.mxu0 0
          %1985 = vmatprep.subr.bf16.mxu0 0
          %1986 = vmatpush2.bf16.msra.mxu0 0
          %1987 = vmatprep.subr.bf16.mxu0 0
          %1988 = vmatpush2.bf16.msra.mxu0 0
          %1989 = vmatprep.subr.bf16.mxu0 0
          %1990 = vmatpush2.bf16.msra.mxu0 0
          %1991 = vmatprep.mubr.bf16.mxu0 0
          %1992 = vmatmul.mubr.bf16.gmra.mxu0 %v1887
          %v1993 = vpop.f32.mrf.mxu0
          %v1994 = vadd.f32 %v1909, %v1993
          %v1995 = vpop.f32.mrf.mxu0
          %v1996 = vpop.f32.mrf.mxu0
          %v1997 = vpop.f32.mrf.mxu0
          %1998 = vdwg.mxu0
          %1999 = vst [vmem:[%s26] sm:$0xff] %v1994
        $region144: #{gnn_forward.1} parent=123 // pred_fallthru
          _
        // Predicated region
        $region145: #{gnn_forward.1} parent=123 // pred_check
          %p2000 = pneg %p682
        $region146: #{gnn_forward.1} parent=123 // pred_check_branch
          %2002 = sbr.rel (%p2000) target = $region148
        $region147: #{gnn_forward.1} parent=123 // pred_region
          _
        $region148: #{gnn_forward.1} parent=123 // pred_fallthru
          _
        // Predicated region
        $region149: #{gnn_forward.1} parent=123 // pred_check
          %p2003 = pneg %p682
        $region150: #{gnn_forward.1} parent=123 // pred_check_branch
          %2005 = sbr.rel (%p2003) target = $region152
        $region151: #{gnn_forward.1} parent=123 // pred_region
          _
        $region152: #{gnn_forward.1} parent=123 // pred_fallthru
          _
      $region124: #{gnn_forward.1} parent=5 // pred_fallthru
        _
      %p2006 = scmp.le.s32.totalorder 2, %s33
      // Predicated region
      $region153: #{gnn_forward.1} parent=5 // pred_check
        %p2007 = pneg %p2006
      $region154: #{gnn_forward.1} parent=5 // pred_check_branch
        %2009 = sbr.rel (%p2007) target = $region156
      $region155: #{gnn_forward.1} parent=5 // pred_region
        %s2010 = ssub.s32 %s33, 2
      $region156: #{gnn_forward.1} parent=5 // pred_fallthru
        _
    $region6: #{gnn_forward.1} parent=1 // loop_footer
      %s37 = sadd.s32 1, %s33
    $region7: #{gnn_forward.1} parent=1 // loop_footer_branch
      %32 = sbr.rel target = $region3
    $region8: #{gnn_forward.1} parent=1 // loop_exit
      _
    %2011 = vsyncpa [#allocation5], 1
    %s2012 = scalar_lea.sflag [#allocation5], 1
    %2013 = vsyncpa %s2012, 1

</llo_original>
